<compile_context>
chip_gen: v7x
topology: tpu7x:2x2x1
jax: 0.10.0
libtpu: 0.0.40
codegen_flags: <defaults>
</compile_context>

<pallas_src>
import functools

import jax
import jax.numpy as jnp
from jax import lax
from jax.experimental import pallas as pl
from jax.experimental.pallas import tpu as pltpu


# ----------------------------------------------------------------------------
# Fused Pallas kernel: all transformer layers + classification head
# ----------------------------------------------------------------------------
def _fused_transformer_kernel(n_head, seq_len,
                              x_ref, wq_ref, wk_ref, wv_ref, wf_ref,
                              w1_ref, w2_ref, vec_ref, wcls_ref, bcls_ref,
                              o_ref,
                              x_acc):
    """Grid = (batch_tiles, n_layer). Activation tile is resident in VMEM scratch."""
    layer = pl.program_id(1)
    n_layer = pl.num_programs(1)

    # Load the embedded activations into the resident 2-D scratch at layer 0.
    @pl.when(layer == 0)
    def _():
        x_acc[...] = x_ref[...]

    rows, D = x_acc.shape                   # rows = bb * T (lane/sublane-dense 2-D)
    T = seq_len
    bb = rows // T
    H = n_head

    x2 = x_acc[...]                          # (rows, D) f32 resident activation
    x2b = x2.astype(jnp.bfloat16)            # bf16 operand for the MXU

    # Per-layer weights (streamed one layer per grid step, bf16).
    wq = wq_ref[0]                           # (H, D, D), 1/sqrt(D) already folded in
    wk = wk_ref[0]                           # (H, D, D)
    wv = wv_ref[0]                           # (H, D, D)
    wf = wf_ref[0]                           # (H, D, D) output projection, per head
    w1 = w1_ref[0]                           # (D, D)
    w2 = w2_ref[0]                           # (D, D)
    vec = vec_ref[0]                         # (8, D) f32: bf,g1,be1,b1,b2,g2,be2,pad
    bf_, g1, be1 = vec[0:1], vec[1:2], vec[2:3]
    b1, b2 = vec[3:4], vec[4:5]
    g2, be2 = vec[5:6], vec[6:7]

    # --- multi-head self-attention -------------------------------------------
    # Per-head contiguous matmuls (no sub-128 lane slicing / no lane concat);
    # the output projection is folded as an accumulation over heads.
    attn = None
    for h in range(H):                       # static unroll over heads
        qh = jnp.dot(x2b, wq[h], preferred_element_type=jnp.float32)   # (rows, D)
        kh = jnp.dot(x2b, wk[h], preferred_element_type=jnp.float32)
        vh = jnp.dot(x2b, wv[h], preferred_element_type=jnp.float32)
        q3 = qh.reshape(bb, T, D).astype(jnp.bfloat16)
        k3 = kh.reshape(bb, T, D).astype(jnp.bfloat16)
        v3 = vh.reshape(bb, T, D).astype(jnp.bfloat16)
        s = jnp.einsum('btd,bsd->bts', q3, k3,
                       preferred_element_type=jnp.float32)             # (bb, T, T) f32
        m = jnp.max(s, axis=-1, keepdims=True)
        p = jnp.exp(s - m)
        w = p * pl.reciprocal(jnp.sum(p, axis=-1, keepdims=True), approx=True)
        yh = jnp.einsum('bts,bsd->btd', w.astype(jnp.bfloat16), v3,
                        preferred_element_type=jnp.float32)             # (bb, T, D)
        contrib = jnp.dot(yh.reshape(rows, D).astype(jnp.bfloat16), wf[h],
                          preferred_element_type=jnp.float32)           # (rows, D)
        attn = contrib if attn is None else attn + contrib
    attn = attn + bf_                                                   # (rows, D) f32

    # --- residual + LayerNorm1 (f32 element-wise math) -------------------------
    r1 = x2 + attn
    mu1 = jnp.mean(r1, axis=-1, keepdims=True)
    var1 = jnp.mean((r1 - mu1) ** 2, axis=-1, keepdims=True)
    x1n = (r1 - mu1) * lax.rsqrt(var1 + 1e-5) * g1 + be1

    # --- FFN: linear2(relu(linear1(x))) ----------------------------------------
    h1 = jnp.maximum(
        jnp.dot(x1n.astype(jnp.bfloat16), w1, preferred_element_type=jnp.float32) + b1,
        0.0)
    h2 = jnp.dot(h1.astype(jnp.bfloat16), w2, preferred_element_type=jnp.float32) + b2

    # --- residual + LayerNorm2 --------------------------------------------------
    r2 = x1n + h2
    mu2 = jnp.mean(r2, axis=-1, keepdims=True)
    var2 = jnp.mean((r2 - mu2) ** 2, axis=-1, keepdims=True)
    x_out = (r2 - mu2) * lax.rsqrt(var2 + 1e-5) * g2 + be2              # (rows, D)

    x_acc[...] = x_out

    # --- mean-pool + classifier + log_softmax, only after the last layer --------
    @pl.when(layer == n_layer - 1)
    def _():
        pooled = jnp.mean(x_out.reshape(bb, T, D), axis=1)              # (bb, D)
        logits = jnp.dot(pooled.astype(jnp.bfloat16), wcls_ref[...],
                         preferred_element_type=jnp.float32) + bcls_ref[...]
        # Padded class lanes carry -1e30 from b_cls, so exp() underflows to 0 and
        # they drop out of the logsumexp; wrapper slices them away.
        mx = jnp.max(logits, axis=-1, keepdims=True)
        lse = mx + jnp.log(jnp.sum(jnp.exp(logits - mx), axis=-1, keepdims=True))
        o_ref[...] = logits - lse                                        # (bb, C_pad)


# ----------------------------------------------------------------------------
# Python wrapper around pallas_call
# ----------------------------------------------------------------------------
def classification_transformer_fused(x_emb, params, n_head, *, batch_block=None):
    B, T, D = x_emb.shape
    H = n_head
    n_layer = params["wq"].shape[0]
    C_pad = params["w_cls"].shape[1]
    # batch_block=None -> single batch tile (weights streamed once; best for v5e/v6e).
    # On v7x pass batch_block=B//2 so the "parallel" axis spans both TensorCores.
    bb = B if batch_block is None else batch_block
    assert B % bb == 0
    # Note: T is a sublane multiple (8) in the demo, so the 2-D<->3-D reshapes
    # used for attention are layout-cheap.

    x2d = x_emb.reshape(B * T, D).astype(jnp.float32)   # lane/sublane-dense 2-D slab

    kernel = functools.partial(_fused_transformer_kernel, n_head, T)

    def w_map4(b, l):
        return (l, 0, 0, 0)

    def w_map3(b, l):
        return (l, 0, 0)

    # --- explicit VMEM budget (double-buffered blocks + resident scratch) ------
    wblk = (4 * H * D * D + 2 * D * D) * 2 + 8 * D * 4      # bf16 weights + f32 vecs / layer
    xblk = bb * T * D * 4
    clsblk = D * C_pad * 2 + C_pad * 4
    outblk = bb * C_pad * 4
    vmem_bytes = 2 * (wblk + xblk + clsblk + outblk) + xblk
    vmem_limit = int(min(96 * 2 ** 20, max(16 * 2 ** 20, 2 * vmem_bytes)))

    # --- advisory cost estimate for the XLA scheduler ---------------------------
    rows_total = B * T
    flops = n_layer * (2 * rows_total * D * D * 4 * H        # q/k/v/out-proj per head
                       + 4 * B * H * T * T * D               # scores + weighted sum
                       + 4 * rows_total * D * D               # FFN
                       ) + 2 * B * D * C_pad
    transcendentals = n_layer * (B * H * T * T + 2 * rows_total) + B * C_pad
    bytes_accessed = (rows_total * D * 4 + B * C_pad * 4
                      + (B // bb) * n_layer * wblk + clsblk)
    cost = pl.CostEstimate(flops=int(flops),
                           transcendentals=int(transcendentals),
                           bytes_accessed=int(bytes_accessed))

    return pl.pallas_call(
        kernel,
        out_shape=jax.ShapeDtypeStruct((B, C_pad), jnp.float32),
        grid=(B // bb, n_layer),
        in_specs=[
            pl.BlockSpec((bb * T, D), lambda b, l: (b, 0)),   # embedded x (2-D slab)
            pl.BlockSpec((1, H, D, D), w_map4),               # wq (scaled), per head
            pl.BlockSpec((1, H, D, D), w_map4),               # wk
            pl.BlockSpec((1, H, D, D), w_map4),               # wv
            pl.BlockSpec((1, H, D, D), w_map4),               # wf (output proj, per head)
            pl.BlockSpec((1, D, D), w_map3),                  # W1
            pl.BlockSpec((1, D, D), w_map3),                  # W2
            pl.BlockSpec((1, 8, D), w_map3),                  # packed (1,D) vectors
            pl.BlockSpec((D, C_pad), lambda b, l: (0, 0)),    # w_cls (lane-padded)
            pl.BlockSpec((1, C_pad), lambda b, l: (0, 0)),    # b_cls (lane-padded)
        ],
        out_specs=pl.BlockSpec((bb, C_pad), lambda b, l: (b, 0)),
        scratch_shapes=[pltpu.VMEM((bb * T, D), jnp.float32)],
        compiler_params=pltpu.CompilerParams(
            dimension_semantics=("parallel", "arbitrary"),
            vmem_limit_bytes=vmem_limit),
        cost_estimate=cost,
    )(x2d, params["wq"], params["wk"], params["wv"], params["wf"],
      params["w1"], params["w2"], params["vecs"], params["w_cls"], params["b_cls"])


# ----------------------------------------------------------------------------
# Parameter construction (mimics the PyTorch __init__ distributions, but stored
# per-head-split, stacked per layer, bf16 for MXU operands, and with the
# attention 1/sqrt(D) scale folded into wq).
# ----------------------------------------------------------------------------
def init_params(key, n_layer, n_head, d_embed, n_token, n_sequence, n_class):
    D, H = d_embed, n_head
    HD = H * D
    C_pad = ((n_class + 127) // 128) * 128
    factor = 2.0 / (D ** 0.5)
    lin_bound = 1.0 / (D ** 0.5)
    inv_sqrt_d = 1.0 / (D ** 0.5)
    keys = iter(jax.random.split(key, 9 * n_layer + 8))

    def u(shape, lo, hi):
        return jax.random.uniform(next(keys), shape, jnp.float32, lo, hi)

    def split_in(w):         # (D, H*D) -> (H, D, D): column h*D+d -> head h, col d
        return jnp.transpose(w.reshape(D, H, D), (1, 0, 2))

    tok_emb = jax.random.normal(next(keys), (n_token, D), jnp.float32)   # nn.Embedding ~ N(0,1)
    pos_emb = jax.random.normal(next(keys), (n_sequence, D), jnp.float32)

    wq_l, wk_l, wv_l, wf_l, w1_l, w2_l, vec_l = ([] for _ in range(7))
    for _ in range(n_layer):
        # SelfAttention: factor * (rand(...) - 1) -> U[-factor, 0)
        wq = split_in(u((D, HD), -factor, 0.0) * inv_sqrt_d)  # fold 1/sqrt(D) scale
        wk = split_in(u((D, HD), -factor, 0.0))
        wv = split_in(u((D, HD), -factor, 0.0))
        wf = u((HD, D), -factor, 0.0).reshape(H, D, D)        # row h*D+d -> head h, row d
        bf = u((1, D), -factor, 0.0)
        g1 = jnp.ones((1, D), jnp.float32)                    # LayerNorm1
        be1 = jnp.zeros((1, D), jnp.float32)
        w1 = u((D, D), -lin_bound, lin_bound)                 # linear1 (in, out)
        b1 = u((1, D), -lin_bound, lin_bound)
        w2 = u((D, D), -lin_bound, lin_bound)                 # linear2
        b2 = u((1, D), -lin_bound, lin_bound)
        g2 = jnp.ones((1, D), jnp.float32)                    # LayerNorm2
        be2 = jnp.zeros((1, D), jnp.float32)

        wq_l.append(wq); wk_l.append(wk); wv_l.append(wv); wf_l.append(wf)
        w1_l.append(w1); w2_l.append(w2)
        vec_l.append(jnp.concatenate(
            [bf, g1, be1, b1, b2, g2, be2, jnp.zeros((1, D), jnp.float32)], axis=0))

    w_cls = u((D, n_class), -lin_bound, lin_bound)
    b_cls = u((1, n_class), -lin_bound, lin_bound)
    w_cls_pad = jnp.zeros((D, C_pad), jnp.float32).at[:, :n_class].set(w_cls)
    b_cls_pad = jnp.full((1, C_pad), -1e30, jnp.float32).at[:, :n_class].set(b_cls)

    return {
        "tok_emb": tok_emb,
        "pos_emb": pos_emb,
        "wq": jnp.stack(wq_l).astype(jnp.bfloat16),    # (n_layer, H, D, D)
        "wk": jnp.stack(wk_l).astype(jnp.bfloat16),
        "wv": jnp.stack(wv_l).astype(jnp.bfloat16),
        "wf": jnp.stack(wf_l).astype(jnp.bfloat16),
        "w1": jnp.stack(w1_l).astype(jnp.bfloat16),    # (n_layer, D, D)
        "w2": jnp.stack(w2_l).astype(jnp.bfloat16),
        "vecs": jnp.stack(vec_l),                      # (n_layer, 8, D) f32
        "w_cls": w_cls_pad.astype(jnp.bfloat16),       # (D, C_pad)
        "b_cls": b_cls_pad,                            # (1, C_pad) f32, pads = -1e30
        "n_class": n_class,
    }


# ----------------------------------------------------------------------------
# Full forward pass
# ----------------------------------------------------------------------------
def classification_transformer(tokens, params, n_head, embedding_pos=True,
                               batch_block=None):
    # Embedding lookup is gather glue (plain JAX); everything else is one Pallas kernel.
    x = jnp.take(params["tok_emb"], tokens, axis=0)            # (B, T, D)
    if embedding_pos:
        T = tokens.shape[1]
        x = x + params["pos_emb"][:T][None, :, :]
    # TODO(synk): EmbeddingBlock dropout(p=0.5) is identity at inference; not modeled.
    logits = classification_transformer_fused(x, params, n_head,
                                              batch_block=batch_block)
    return logits[:, :params["n_class"]]


# ----------------------------------------------------------------------------
if __name__ == "__main__":
    n_layer, n_head, d_embed = 2, 2, 32
    n_token, n_sequence, n_class = 50, 16, 4
    B, T = 2, 8

    key = jax.random.PRNGKey(0)
    pkey, tkey = jax.random.split(key)
    params = init_params(pkey, n_layer, n_head, d_embed, n_token, n_sequence, n_class)
    tokens = jax.random.randint(tkey, (B, T), 0, n_token, dtype=jnp.int32)

    out = classification_transformer(tokens, params, n_head, embedding_pos=True)
    out = jax.block_until_ready(out)
    assert out.shape == (B, n_class)
    assert bool(jnp.all(jnp.isfinite(out)))
    # log_softmax rows should sum to ~1 in probability space.
    assert bool(jnp.all(jnp.abs(jnp.sum(jnp.exp(out), axis=-1) - 1.0) < 1e-2))
    print("KERNEL_OK")
</pallas_src>

<mosaic_0001>
module attributes {stable_mosaic.version = 11 : i64} {
  func.func @_fused_transformer_kernel(%arg0: i32, %arg1: i32, %arg2: memref<16x32xf32, #tpu.memory_space<vmem>>, %arg3: memref<1x2x32x32xbf16, #tpu.memory_space<vmem>>, %arg4: memref<1x2x32x32xbf16, #tpu.memory_space<vmem>>, %arg5: memref<1x2x32x32xbf16, #tpu.memory_space<vmem>>, %arg6: memref<1x2x32x32xbf16, #tpu.memory_space<vmem>>, %arg7: memref<1x32x32xbf16, #tpu.memory_space<vmem>>, %arg8: memref<1x32x32xbf16, #tpu.memory_space<vmem>>, %arg9: memref<1x8x32xf32, #tpu.memory_space<vmem>>, %arg10: memref<32x128xbf16, #tpu.memory_space<vmem>>, %arg11: memref<1x128xf32, #tpu.memory_space<vmem>>, %arg12: memref<2x128xf32, #tpu.memory_space<vmem>>, %arg13: memref<16x32xf32, #tpu.memory_space<vmem>>) attributes {dimension_semantics = [#tpu.dimension_semantics<parallel>, #tpu.dimension_semantics<arbitrary>], iteration_bounds = array<i64: 1, 2>, scalar_prefetch = 0 : i64, scratch_operands = 1 : i64, tpu.core_type = #tpu.core_type<tc>, window_params = [{transform_indices = @transform_0, window_bounds = array<i64: 16, 32>}, {transform_indices = @transform_1, window_bounds = array<i64: 1, 2, 32, 32>}, {transform_indices = @transform_2, window_bounds = array<i64: 1, 2, 32, 32>}, {transform_indices = @transform_3, window_bounds = array<i64: 1, 2, 32, 32>}, {transform_indices = @transform_4, window_bounds = array<i64: 1, 2, 32, 32>}, {transform_indices = @transform_5, window_bounds = array<i64: 1, 32, 32>}, {transform_indices = @transform_6, window_bounds = array<i64: 1, 32, 32>}, {transform_indices = @transform_7, window_bounds = array<i64: 1, 8, 32>}, {pipeline_mode = #tpu.pipeline_mode<synchronous>, transform_indices = @transform_8, window_bounds = array<i64: 32, 128>}, {pipeline_mode = #tpu.pipeline_mode<synchronous>, transform_indices = @transform_9, window_bounds = array<i64: 1, 128>}, {transform_indices = @transform_10, window_bounds = array<i64: 2, 128>}]} {
    %c0_i32 = arith.constant 0 : i32
    %0 = arith.cmpi eq, %arg1, %c0_i32 : i32
    %1 = arith.extui %0 : i1 to i32
    %c0_i32_0 = arith.constant 0 : i32
    %2 = arith.cmpi ne, %1, %c0_i32_0 : i32
    scf.if %2 {
      %c0_58 = arith.constant 0 : index
      %c0_59 = arith.constant 0 : index
      %155 = vector.load %arg2[%c0_58, %c0_59] : memref<16x32xf32, #tpu.memory_space<vmem>>, vector<16x32xf32>
      %c0_60 = arith.constant 0 : index
      %c0_61 = arith.constant 0 : index
      %156 = vector.load %arg13[%c0_60, %c0_61] : memref<16x32xf32, #tpu.memory_space<vmem>>, vector<16x32xf32>
      tpu.vector_store %arg13[%c0_60, %c0_61], %155 {strides = array<i32>} : memref<16x32xf32, #tpu.memory_space<vmem>>, vector<16x32xf32>,
    } else {
    }
    %c0 = arith.constant 0 : index
    %c0_1 = arith.constant 0 : index
    %3 = vector.load %arg13[%c0, %c0_1] : memref<16x32xf32, #tpu.memory_space<vmem>>, vector<16x32xf32>
    %4 = arith.truncf %3 : vector<16x32xf32> to vector<16x32xbf16>
    %c0_2 = arith.constant 0 : index
    %c0_3 = arith.constant 0 : index
    %c0_4 = arith.constant 0 : index
    %c0_5 = arith.constant 0 : index
    %5 = vector.load %arg3[%c0_2, %c0_3, %c0_4, %c0_5] : memref<1x2x32x32xbf16, #tpu.memory_space<vmem>>, vector<1x2x32x32xbf16>
    %6 = vector.shape_cast %5 : vector<1x2x32x32xbf16> to vector<2x32x32xbf16>
    %c0_6 = arith.constant 0 : index
    %c0_7 = arith.constant 0 : index
    %c0_8 = arith.constant 0 : index
    %c0_9 = arith.constant 0 : index
    %7 = vector.load %arg4[%c0_6, %c0_7, %c0_8, %c0_9] : memref<1x2x32x32xbf16, #tpu.memory_space<vmem>>, vector<1x2x32x32xbf16>
    %8 = vector.shape_cast %7 : vector<1x2x32x32xbf16> to vector<2x32x32xbf16>
    %c0_10 = arith.constant 0 : index
    %c0_11 = arith.constant 0 : index
    %c0_12 = arith.constant 0 : index
    %c0_13 = arith.constant 0 : index
    %9 = vector.load %arg5[%c0_10, %c0_11, %c0_12, %c0_13] : memref<1x2x32x32xbf16, #tpu.memory_space<vmem>>, vector<1x2x32x32xbf16>
    %10 = vector.shape_cast %9 : vector<1x2x32x32xbf16> to vector<2x32x32xbf16>
    %c0_14 = arith.constant 0 : index
    %c0_15 = arith.constant 0 : index
    %c0_16 = arith.constant 0 : index
    %c0_17 = arith.constant 0 : index
    %11 = vector.load %arg6[%c0_14, %c0_15, %c0_16, %c0_17] : memref<1x2x32x32xbf16, #tpu.memory_space<vmem>>, vector<1x2x32x32xbf16>
    %12 = vector.shape_cast %11 : vector<1x2x32x32xbf16> to vector<2x32x32xbf16>
    %c0_18 = arith.constant 0 : index
    %c0_19 = arith.constant 0 : index
    %c0_20 = arith.constant 0 : index
    %13 = vector.load %arg7[%c0_18, %c0_19, %c0_20] : memref<1x32x32xbf16, #tpu.memory_space<vmem>>, vector<1x32x32xbf16>
    %14 = vector.shape_cast %13 : vector<1x32x32xbf16> to vector<32x32xbf16>
    %c0_21 = arith.constant 0 : index
    %c0_22 = arith.constant 0 : index
    %c0_23 = arith.constant 0 : index
    %15 = vector.load %arg8[%c0_21, %c0_22, %c0_23] : memref<1x32x32xbf16, #tpu.memory_space<vmem>>, vector<1x32x32xbf16>
    %16 = vector.shape_cast %15 : vector<1x32x32xbf16> to vector<32x32xbf16>
    %c0_24 = arith.constant 0 : index
    %c0_25 = arith.constant 0 : index
    %c0_26 = arith.constant 0 : index
    %17 = vector.load %arg9[%c0_24, %c0_25, %c0_26] : memref<1x8x32xf32, #tpu.memory_space<vmem>>, vector<1x8x32xf32>
    %18 = vector.shape_cast %17 : vector<1x8x32xf32> to vector<8x32xf32>
    %19 = vector.extract_strided_slice %18 {offsets = [0, 0], sizes = [1, 32], strides = [1, 1]} : vector<8x32xf32> to vector<1x32xf32>
    %20 = vector.extract_strided_slice %18 {offsets = [1, 0], sizes = [1, 32], strides = [1, 1]} : vector<8x32xf32> to vector<1x32xf32>
    %21 = vector.extract_strided_slice %18 {offsets = [2, 0], sizes = [1, 32], strides = [1, 1]} : vector<8x32xf32> to vector<1x32xf32>
    %22 = vector.extract_strided_slice %18 {offsets = [3, 0], sizes = [1, 32], strides = [1, 1]} : vector<8x32xf32> to vector<1x32xf32>
    %23 = vector.extract_strided_slice %18 {offsets = [4, 0], sizes = [1, 32], strides = [1, 1]} : vector<8x32xf32> to vector<1x32xf32>
    %24 = vector.extract_strided_slice %18 {offsets = [5, 0], sizes = [1, 32], strides = [1, 1]} : vector<8x32xf32> to vector<1x32xf32>
    %25 = vector.extract_strided_slice %18 {offsets = [6, 0], sizes = [1, 32], strides = [1, 1]} : vector<8x32xf32> to vector<1x32xf32>
    %26 = vector.extract_strided_slice %6 {offsets = [0, 0, 0], sizes = [1, 32, 32], strides = [1, 1, 1]} : vector<2x32x32xbf16> to vector<1x32x32xbf16>
    %27 = vector.shape_cast %26 : vector<1x32x32xbf16> to vector<32x32xbf16>
    %cst = arith.constant dense<0.000000e+00> : vector<16x32xf32>
    %28 = tpu.matmul %4, %27, %cst {dimension_numbers = #tpu.dot_dimension_numbers<[1], [0], [0], [1], [0, 0, 1, 1], [], []>} : vector<16x32xbf16>, vector<32x32xbf16>, vector<16x32xf32> -> vector<16x32xf32>
    %29 = vector.extract_strided_slice %8 {offsets = [0, 0, 0], sizes = [1, 32, 32], strides = [1, 1, 1]} : vector<2x32x32xbf16> to vector<1x32x32xbf16>
    %30 = vector.shape_cast %29 : vector<1x32x32xbf16> to vector<32x32xbf16>
    %cst_27 = arith.constant dense<0.000000e+00> : vector<16x32xf32>
    %31 = tpu.matmul %4, %30, %cst_27 {dimension_numbers = #tpu.dot_dimension_numbers<[1], [0], [0], [1], [0, 0, 1, 1], [], []>} : vector<16x32xbf16>, vector<32x32xbf16>, vector<16x32xf32> -> vector<16x32xf32>
    %32 = vector.extract_strided_slice %10 {offsets = [0, 0, 0], sizes = [1, 32, 32], strides = [1, 1, 1]} : vector<2x32x32xbf16> to vector<1x32x32xbf16>
    %33 = vector.shape_cast %32 : vector<1x32x32xbf16> to vector<32x32xbf16>
    %cst_28 = arith.constant dense<0.000000e+00> : vector<16x32xf32>
    %34 = tpu.matmul %4, %33, %cst_28 {dimension_numbers = #tpu.dot_dimension_numbers<[1], [0], [0], [1], [0, 0, 1, 1], [], []>} : vector<16x32xbf16>, vector<32x32xbf16>, vector<16x32xf32> -> vector<16x32xf32>
    %35 = vector.shape_cast %28 : vector<16x32xf32> to vector<2x8x32xf32>
    %36 = arith.truncf %35 : vector<2x8x32xf32> to vector<2x8x32xbf16>
    %37 = vector.shape_cast %31 : vector<16x32xf32> to vector<2x8x32xf32>
    %38 = arith.truncf %37 : vector<2x8x32xf32> to vector<2x8x32xbf16>
    %39 = vector.shape_cast %34 : vector<16x32xf32> to vector<2x8x32xf32>
    %40 = arith.truncf %39 : vector<2x8x32xf32> to vector<2x8x32xbf16>
    "tpu.trace_start"() <{level = 10 : i32, message = "btd,bsd->bts"}> : () -> ()
    %cst_29 = arith.constant dense<0.000000e+00> : vector<2x8x8xf32>
    %41 = tpu.matmul %36, %38, %cst_29 {dimension_numbers = #tpu.dot_dimension_numbers<[2], [2], [1], [1], [0, 0, 0, 1, 1, 1], [0], [0]>} : vector<2x8x32xbf16>, vector<2x8x32xbf16>, vector<2x8x8xf32> -> vector<2x8x8xf32>
    "tpu.trace_stop"() : () -> ()
    %cst_30 = arith.constant dense<0xFF800000> : vector<2x8xf32>
    %42 = vector.multi_reduction <maximumf>, %41, %cst_30 [2] : vector<2x8x8xf32> to vector<2x8xf32>
    %43 = vector.shape_cast %42 : vector<2x8xf32> to vector<2x8x1xf32>
    %44 = vector.broadcast %43 : vector<2x8x1xf32> to vector<2x8x8xf32>
    %45 = arith.subf %41, %44 : vector<2x8x8xf32>
    %46 = math.exp %45 : vector<2x8x8xf32>
    %cst_31 = arith.constant dense<0.000000e+00> : vector<2x8xf32>
    %47 = vector.multi_reduction <add>, %46, %cst_31 [2] : vector<2x8x8xf32> to vector<2x8xf32>
    %48 = vector.shape_cast %47 : vector<2x8xf32> to vector<2x8x1xf32>
    %49 = tpu.reciprocal %48 {approx = true} : vector<2x8x1xf32> -> vector<2x8x1xf32>
    %50 = vector.broadcast %49 : vector<2x8x1xf32> to vector<2x8x8xf32>
    %51 = arith.mulf %46, %50 : vector<2x8x8xf32>
    %52 = arith.truncf %51 : vector<2x8x8xf32> to vector<2x8x8xbf16>
    "tpu.trace_start"() <{level = 10 : i32, message = "bts,bsd->btd"}> : () -> ()
    %cst_32 = arith.constant dense<0.000000e+00> : vector<2x8x32xf32>
    %53 = tpu.matmul %52, %40, %cst_32 {dimension_numbers = #tpu.dot_dimension_numbers<[2], [1], [1], [2], [0, 0, 0, 1, 1, 2], [0], [0]>} : vector<2x8x8xbf16>, vector<2x8x32xbf16>, vector<2x8x32xf32> -> vector<2x8x32xf32>
    "tpu.trace_stop"() : () -> ()
    %54 = vector.shape_cast %53 : vector<2x8x32xf32> to vector<16x32xf32>
    %55 = arith.truncf %54 : vector<16x32xf32> to vector<16x32xbf16>
    %56 = vector.extract_strided_slice %12 {offsets = [0, 0, 0], sizes = [1, 32, 32], strides = [1, 1, 1]} : vector<2x32x32xbf16> to vector<1x32x32xbf16>
    %57 = vector.shape_cast %56 : vector<1x32x32xbf16> to vector<32x32xbf16>
    %cst_33 = arith.constant dense<0.000000e+00> : vector<16x32xf32>
    %58 = tpu.matmul %55, %57, %cst_33 {dimension_numbers = #tpu.dot_dimension_numbers<[1], [0], [0], [1], [0, 0, 1, 1], [], []>} : vector<16x32xbf16>, vector<32x32xbf16>, vector<16x32xf32> -> vector<16x32xf32>
    %59 = vector.extract_strided_slice %6 {offsets = [1, 0, 0], sizes = [1, 32, 32], strides = [1, 1, 1]} : vector<2x32x32xbf16> to vector<1x32x32xbf16>
    %60 = vector.shape_cast %59 : vector<1x32x32xbf16> to vector<32x32xbf16>
    %cst_34 = arith.constant dense<0.000000e+00> : vector<16x32xf32>
    %61 = tpu.matmul %4, %60, %cst_34 {dimension_numbers = #tpu.dot_dimension_numbers<[1], [0], [0], [1], [0, 0, 1, 1], [], []>} : vector<16x32xbf16>, vector<32x32xbf16>, vector<16x32xf32> -> vector<16x32xf32>
    %62 = vector.extract_strided_slice %8 {offsets = [1, 0, 0], sizes = [1, 32, 32], strides = [1, 1, 1]} : vector<2x32x32xbf16> to vector<1x32x32xbf16>
    %63 = vector.shape_cast %62 : vector<1x32x32xbf16> to vector<32x32xbf16>
    %cst_35 = arith.constant dense<0.000000e+00> : vector<16x32xf32>
    %64 = tpu.matmul %4, %63, %cst_35 {dimension_numbers = #tpu.dot_dimension_numbers<[1], [0], [0], [1], [0, 0, 1, 1], [], []>} : vector<16x32xbf16>, vector<32x32xbf16>, vector<16x32xf32> -> vector<16x32xf32>
    %65 = vector.extract_strided_slice %10 {offsets = [1, 0, 0], sizes = [1, 32, 32], strides = [1, 1, 1]} : vector<2x32x32xbf16> to vector<1x32x32xbf16>
    %66 = vector.shape_cast %65 : vector<1x32x32xbf16> to vector<32x32xbf16>
    %cst_36 = arith.constant dense<0.000000e+00> : vector<16x32xf32>
    %67 = tpu.matmul %4, %66, %cst_36 {dimension_numbers = #tpu.dot_dimension_numbers<[1], [0], [0], [1], [0, 0, 1, 1], [], []>} : vector<16x32xbf16>, vector<32x32xbf16>, vector<16x32xf32> -> vector<16x32xf32>
    %68 = vector.shape_cast %61 : vector<16x32xf32> to vector<2x8x32xf32>
    %69 = arith.truncf %68 : vector<2x8x32xf32> to vector<2x8x32xbf16>
    %70 = vector.shape_cast %64 : vector<16x32xf32> to vector<2x8x32xf32>
    %71 = arith.truncf %70 : vector<2x8x32xf32> to vector<2x8x32xbf16>
    %72 = vector.shape_cast %67 : vector<16x32xf32> to vector<2x8x32xf32>
    %73 = arith.truncf %72 : vector<2x8x32xf32> to vector<2x8x32xbf16>
    "tpu.trace_start"() <{level = 10 : i32, message = "btd,bsd->bts"}> : () -> ()
    %cst_37 = arith.constant dense<0.000000e+00> : vector<2x8x8xf32>
    %74 = tpu.matmul %69, %71, %cst_37 {dimension_numbers = #tpu.dot_dimension_numbers<[2], [2], [1], [1], [0, 0, 0, 1, 1, 1], [0], [0]>} : vector<2x8x32xbf16>, vector<2x8x32xbf16>, vector<2x8x8xf32> -> vector<2x8x8xf32>
    "tpu.trace_stop"() : () -> ()
    %cst_38 = arith.constant dense<0xFF800000> : vector<2x8xf32>
    %75 = vector.multi_reduction <maximumf>, %74, %cst_38 [2] : vector<2x8x8xf32> to vector<2x8xf32>
    %76 = vector.shape_cast %75 : vector<2x8xf32> to vector<2x8x1xf32>
    %77 = vector.broadcast %76 : vector<2x8x1xf32> to vector<2x8x8xf32>
    %78 = arith.subf %74, %77 : vector<2x8x8xf32>
    %79 = math.exp %78 : vector<2x8x8xf32>
    %cst_39 = arith.constant dense<0.000000e+00> : vector<2x8xf32>
    %80 = vector.multi_reduction <add>, %79, %cst_39 [2] : vector<2x8x8xf32> to vector<2x8xf32>
    %81 = vector.shape_cast %80 : vector<2x8xf32> to vector<2x8x1xf32>
    %82 = tpu.reciprocal %81 {approx = true} : vector<2x8x1xf32> -> vector<2x8x1xf32>
    %83 = vector.broadcast %82 : vector<2x8x1xf32> to vector<2x8x8xf32>
    %84 = arith.mulf %79, %83 : vector<2x8x8xf32>
    %85 = arith.truncf %84 : vector<2x8x8xf32> to vector<2x8x8xbf16>
    "tpu.trace_start"() <{level = 10 : i32, message = "bts,bsd->btd"}> : () -> ()
    %cst_40 = arith.constant dense<0.000000e+00> : vector<2x8x32xf32>
    %86 = tpu.matmul %85, %73, %cst_40 {dimension_numbers = #tpu.dot_dimension_numbers<[2], [1], [1], [2], [0, 0, 0, 1, 1, 2], [0], [0]>} : vector<2x8x8xbf16>, vector<2x8x32xbf16>, vector<2x8x32xf32> -> vector<2x8x32xf32>
    "tpu.trace_stop"() : () -> ()
    %87 = vector.shape_cast %86 : vector<2x8x32xf32> to vector<16x32xf32>
    %88 = arith.truncf %87 : vector<16x32xf32> to vector<16x32xbf16>
    %89 = vector.extract_strided_slice %12 {offsets = [1, 0, 0], sizes = [1, 32, 32], strides = [1, 1, 1]} : vector<2x32x32xbf16> to vector<1x32x32xbf16>
    %90 = vector.shape_cast %89 : vector<1x32x32xbf16> to vector<32x32xbf16>
    %cst_41 = arith.constant dense<0.000000e+00> : vector<16x32xf32>
    %91 = tpu.matmul %88, %90, %cst_41 {dimension_numbers = #tpu.dot_dimension_numbers<[1], [0], [0], [1], [0, 0, 1, 1], [], []>} : vector<16x32xbf16>, vector<32x32xbf16>, vector<16x32xf32> -> vector<16x32xf32>
    %92 = arith.addf %58, %91 : vector<16x32xf32>
    %93 = vector.broadcast %19 : vector<1x32xf32> to vector<16x32xf32>
    %94 = arith.addf %92, %93 : vector<16x32xf32>
    %95 = arith.addf %3, %94 : vector<16x32xf32>
    %cst_42 = arith.constant dense<0.000000e+00> : vector<16xf32>
    %96 = vector.multi_reduction <add>, %95, %cst_42 [1] : vector<16x32xf32> to vector<16xf32>
    %97 = vector.shape_cast %96 : vector<16xf32> to vector<16x1xf32>
    %cst_43 = arith.constant 3.200000e+01 : f32
    %98 = vector.broadcast %cst_43 : f32 to vector<16x1xf32>
    %99 = arith.divf %97, %98 : vector<16x1xf32>
    %100 = vector.broadcast %99 : vector<16x1xf32> to vector<16x32xf32>
    %101 = arith.subf %95, %100 : vector<16x32xf32>
    %102 = arith.mulf %101, %101 : vector<16x32xf32>
    %cst_44 = arith.constant dense<0.000000e+00> : vector<16xf32>
    %103 = vector.multi_reduction <add>, %102, %cst_44 [1] : vector<16x32xf32> to vector<16xf32>
    %104 = vector.shape_cast %103 : vector<16xf32> to vector<16x1xf32>
    %cst_45 = arith.constant 3.200000e+01 : f32
    %105 = vector.broadcast %cst_45 : f32 to vector<16x1xf32>
    %106 = arith.divf %104, %105 : vector<16x1xf32>
    %107 = vector.broadcast %99 : vector<16x1xf32> to vector<16x32xf32>
    %108 = arith.subf %95, %107 : vector<16x32xf32>
    %cst_46 = arith.constant 9.99999974E-6 : f32
    %109 = vector.broadcast %cst_46 : f32 to vector<16x1xf32>
    %110 = arith.addf %106, %109 : vector<16x1xf32>
    %111 = math.rsqrt %110 : vector<16x1xf32>
    %112 = vector.broadcast %111 : vector<16x1xf32> to vector<16x32xf32>
    %113 = arith.mulf %108, %112 : vector<16x32xf32>
    %114 = vector.broadcast %20 : vector<1x32xf32> to vector<16x32xf32>
    %115 = arith.mulf %113, %114 : vector<16x32xf32>
    %116 = vector.broadcast %21 : vector<1x32xf32> to vector<16x32xf32>
    %117 = arith.addf %115, %116 : vector<16x32xf32>
    %118 = arith.truncf %117 : vector<16x32xf32> to vector<16x32xbf16>
    %cst_47 = arith.constant dense<0.000000e+00> : vector<16x32xf32>
    %119 = tpu.matmul %118, %14, %cst_47 {dimension_numbers = #tpu.dot_dimension_numbers<[1], [0], [0], [1], [0, 0, 1, 1], [], []>} : vector<16x32xbf16>, vector<32x32xbf16>, vector<16x32xf32> -> vector<16x32xf32>
    %120 = vector.broadcast %22 : vector<1x32xf32> to vector<16x32xf32>
    %121 = arith.addf %119, %120 : vector<16x32xf32>
    %cst_48 = arith.constant 0.000000e+00 : f32
    %122 = vector.broadcast %cst_48 : f32 to vector<16x32xf32>
    %123 = arith.maximumf %121, %122 : vector<16x32xf32>
    %124 = arith.truncf %123 : vector<16x32xf32> to vector<16x32xbf16>
    %cst_49 = arith.constant dense<0.000000e+00> : vector<16x32xf32>
    %125 = tpu.matmul %124, %16, %cst_49 {dimension_numbers = #tpu.dot_dimension_numbers<[1], [0], [0], [1], [0, 0, 1, 1], [], []>} : vector<16x32xbf16>, vector<32x32xbf16>, vector<16x32xf32> -> vector<16x32xf32>
    %126 = vector.broadcast %23 : vector<1x32xf32> to vector<16x32xf32>
    %127 = arith.addf %125, %126 : vector<16x32xf32>
    %128 = arith.addf %117, %127 : vector<16x32xf32>
    %cst_50 = arith.constant dense<0.000000e+00> : vector<16xf32>
    %129 = vector.multi_reduction <add>, %128, %cst_50 [1] : vector<16x32xf32> to vector<16xf32>
    %130 = vector.shape_cast %129 : vector<16xf32> to vector<16x1xf32>
    %cst_51 = arith.constant 3.200000e+01 : f32
    %131 = vector.broadcast %cst_51 : f32 to vector<16x1xf32>
    %132 = arith.divf %130, %131 : vector<16x1xf32>
    %133 = vector.broadcast %132 : vector<16x1xf32> to vector<16x32xf32>
    %134 = arith.subf %128, %133 : vector<16x32xf32>
    %135 = arith.mulf %134, %134 : vector<16x32xf32>
    %cst_52 = arith.constant dense<0.000000e+00> : vector<16xf32>
    %136 = vector.multi_reduction <add>, %135, %cst_52 [1] : vector<16x32xf32> to vector<16xf32>
    %137 = vector.shape_cast %136 : vector<16xf32> to vector<16x1xf32>
    %cst_53 = arith.constant 3.200000e+01 : f32
    %138 = vector.broadcast %cst_53 : f32 to vector<16x1xf32>
    %139 = arith.divf %137, %138 : vector<16x1xf32>
    %140 = vector.broadcast %132 : vector<16x1xf32> to vector<16x32xf32>
    %141 = arith.subf %128, %140 : vector<16x32xf32>
    %cst_54 = arith.constant 9.99999974E-6 : f32
    %142 = vector.broadcast %cst_54 : f32 to vector<16x1xf32>
    %143 = arith.addf %139, %142 : vector<16x1xf32>
    %144 = math.rsqrt %143 : vector<16x1xf32>
    %145 = vector.broadcast %144 : vector<16x1xf32> to vector<16x32xf32>
    %146 = arith.mulf %141, %145 : vector<16x32xf32>
    %147 = vector.broadcast %24 : vector<1x32xf32> to vector<16x32xf32>
    %148 = arith.mulf %146, %147 : vector<16x32xf32>
    %149 = vector.broadcast %25 : vector<1x32xf32> to vector<16x32xf32>
    %150 = arith.addf %148, %149 : vector<16x32xf32>
    %c0_55 = arith.constant 0 : index
    %c0_56 = arith.constant 0 : index
    %151 = vector.load %arg13[%c0_55, %c0_56] : memref<16x32xf32, #tpu.memory_space<vmem>>, vector<16x32xf32>
    tpu.vector_store %arg13[%c0_55, %c0_56], %150 {strides = array<i32>} : memref<16x32xf32, #tpu.memory_space<vmem>>, vector<16x32xf32>,
    %c1_i32 = arith.constant 1 : i32
    %152 = arith.cmpi eq, %arg1, %c1_i32 : i32
    %153 = arith.extui %152 : i1 to i32
    %c0_i32_57 = arith.constant 0 : i32
    %154 = arith.cmpi ne, %153, %c0_i32_57 : i32
    scf.if %154 {
      %155 = vector.shape_cast %150 : vector<16x32xf32> to vector<2x8x32xf32>
      %cst_58 = arith.constant dense<0.000000e+00> : vector<2x32xf32>
      %156 = vector.multi_reduction <add>, %155, %cst_58 [1] : vector<2x8x32xf32> to vector<2x32xf32>
      %cst_59 = arith.constant 8.000000e+00 : f32
      %157 = vector.broadcast %cst_59 : f32 to vector<2x32xf32>
      %158 = arith.divf %156, %157 : vector<2x32xf32>
      %159 = arith.truncf %158 : vector<2x32xf32> to vector<2x32xbf16>
      %c0_60 = arith.constant 0 : index
      %c0_61 = arith.constant 0 : index
      %160 = vector.load %arg10[%c0_60, %c0_61] : memref<32x128xbf16, #tpu.memory_space<vmem>>, vector<32x128xbf16>
      %cst_62 = arith.constant dense<0.000000e+00> : vector<2x128xf32>
      %161 = tpu.matmul %159, %160, %cst_62 {dimension_numbers = #tpu.dot_dimension_numbers<[1], [0], [0], [1], [0, 0, 1, 1], [], []>} : vector<2x32xbf16>, vector<32x128xbf16>, vector<2x128xf32> -> vector<2x128xf32>
      %c0_63 = arith.constant 0 : index
      %c0_64 = arith.constant 0 : index
      %162 = vector.load %arg11[%c0_63, %c0_64] : memref<1x128xf32, #tpu.memory_space<vmem>>, vector<1x128xf32>
      %163 = vector.broadcast %162 : vector<1x128xf32> to vector<2x128xf32>
      %164 = arith.addf %161, %163 : vector<2x128xf32>
      %cst_65 = arith.constant dense<0xFF800000> : vector<2xf32>
      %165 = vector.multi_reduction <maximumf>, %164, %cst_65 [1] : vector<2x128xf32> to vector<2xf32>
      %166 = vector.shape_cast %165 : vector<2xf32> to vector<2x1xf32>
      %167 = vector.broadcast %166 : vector<2x1xf32> to vector<2x128xf32>
      %168 = arith.subf %164, %167 : vector<2x128xf32>
      %169 = math.exp %168 : vector<2x128xf32>
      %cst_66 = arith.constant dense<0.000000e+00> : vector<2xf32>
      %170 = vector.multi_reduction <add>, %169, %cst_66 [1] : vector<2x128xf32> to vector<2xf32>
      %171 = vector.shape_cast %170 : vector<2xf32> to vector<2x1xf32>
      %172 = math.log %171 : vector<2x1xf32>
      %173 = arith.addf %166, %172 : vector<2x1xf32>
      %174 = vector.broadcast %173 : vector<2x1xf32> to vector<2x128xf32>
      %175 = arith.subf %164, %174 : vector<2x128xf32>
      %c0_67 = arith.constant 0 : index
      %c0_68 = arith.constant 0 : index
      %176 = vector.load %arg12[%c0_67, %c0_68] : memref<2x128xf32, #tpu.memory_space<vmem>>, vector<2x128xf32>
      tpu.vector_store %arg12[%c0_67, %c0_68], %175 {strides = array<i32>} : memref<2x128xf32, #tpu.memory_space<vmem>>, vector<2x128xf32>,
    } else {
    }
    return
  }
  func.func @transform_0(%arg0: i32, %arg1: i32) -> (i32, i32) {
    %c0_i32 = arith.constant 0 : i32
    %c0_i32_0 = arith.constant 0 : i32
    return %arg0, %c0_i32 : i32, i32
  }
  func.func @transform_1(%arg0: i32, %arg1: i32) -> (i32, i32, i32, i32) {
    %c0_i32 = arith.constant 0 : i32
    %c0_i32_0 = arith.constant 0 : i32
    %c0_i32_1 = arith.constant 0 : i32
    %c0_i32_2 = arith.constant 0 : i32
    return %arg1, %c0_i32, %c0_i32_0, %c0_i32_1 : i32, i32, i32, i32
  }
  func.func @transform_2(%arg0: i32, %arg1: i32) -> (i32, i32, i32, i32) {
    %c0_i32 = arith.constant 0 : i32
    %c0_i32_0 = arith.constant 0 : i32
    %c0_i32_1 = arith.constant 0 : i32
    %c0_i32_2 = arith.constant 0 : i32
    return %arg1, %c0_i32, %c0_i32_0, %c0_i32_1 : i32, i32, i32, i32
  }
  func.func @transform_3(%arg0: i32, %arg1: i32) -> (i32, i32, i32, i32) {
    %c0_i32 = arith.constant 0 : i32
    %c0_i32_0 = arith.constant 0 : i32
    %c0_i32_1 = arith.constant 0 : i32
    %c0_i32_2 = arith.constant 0 : i32
    return %arg1, %c0_i32, %c0_i32_0, %c0_i32_1 : i32, i32, i32, i32
  }
  func.func @transform_4(%arg0: i32, %arg1: i32) -> (i32, i32, i32, i32) {
    %c0_i32 = arith.constant 0 : i32
    %c0_i32_0 = arith.constant 0 : i32
    %c0_i32_1 = arith.constant 0 : i32
    %c0_i32_2 = arith.constant 0 : i32
    return %arg1, %c0_i32, %c0_i32_0, %c0_i32_1 : i32, i32, i32, i32
  }
  func.func @transform_5(%arg0: i32, %arg1: i32) -> (i32, i32, i32) {
    %c0_i32 = arith.constant 0 : i32
    %c0_i32_0 = arith.constant 0 : i32
    %c0_i32_1 = arith.constant 0 : i32
    return %arg1, %c0_i32, %c0_i32_0 : i32, i32, i32
  }
  func.func @transform_6(%arg0: i32, %arg1: i32) -> (i32, i32, i32) {
    %c0_i32 = arith.constant 0 : i32
    %c0_i32_0 = arith.constant 0 : i32
    %c0_i32_1 = arith.constant 0 : i32
    return %arg1, %c0_i32, %c0_i32_0 : i32, i32, i32
  }
  func.func @transform_7(%arg0: i32, %arg1: i32) -> (i32, i32, i32) {
    %c0_i32 = arith.constant 0 : i32
    %c0_i32_0 = arith.constant 0 : i32
    %c0_i32_1 = arith.constant 0 : i32
    return %arg1, %c0_i32, %c0_i32_0 : i32, i32, i32
  }
  func.func @transform_8(%arg0: i32, %arg1: i32) -> (i32, i32) {
    %c0_i32 = arith.constant 0 : i32
    %c0_i32_0 = arith.constant 0 : i32
    %c0_i32_1 = arith.constant 0 : i32
    return %c0_i32, %c0_i32_0 : i32, i32
  }
  func.func @transform_9(%arg0: i32, %arg1: i32) -> (i32, i32) {
    %c0_i32 = arith.constant 0 : i32
    %c0_i32_0 = arith.constant 0 : i32
    %c0_i32_1 = arith.constant 0 : i32
    return %c0_i32, %c0_i32_0 : i32, i32
  }
  func.func @transform_10(%arg0: i32, %arg1: i32) -> (i32, i32) {
    %c0_i32 = arith.constant 0 : i32
    %c0_i32_0 = arith.constant 0 : i32
    return %arg0, %c0_i32 : i32, i32
  }
}

</mosaic_0001>

<llo_original>
// kernel: tpu_custom_call.1
$region0: #{tpu_custom_call.1}
  #allocation0 [shape = 'u32[]', space=smem, size = 0x4, offset = 0x4, fixed_abs, tag = 'smem constant byte address 0x4 - core index']
  #allocation1 [shape = 'u32[144,128]{1,0:T(1,128)}', space=vmem, size = 0x12000, scoped, tag = 'internal scratch']
  #allocation2 [shape = 'f32[16,32]{1,0:T(8,128)}', space=vmem, size = 0x2000, scoped, tag = 'scratch operand']
  %s0 = inlined_call_operand.hbm [shape: f32[16,32], index: 0, kind: input, shape index: {}]
  %s1 = inlined_call_operand.hbm [shape: bf16[2,2,32,32], index: 1, kind: input, shape index: {}]
  %s2 = inlined_call_operand.hbm [shape: bf16[2,2,32,32], index: 2, kind: input, shape index: {}]
  %s3 = inlined_call_operand.hbm [shape: bf16[2,2,32,32], index: 3, kind: input, shape index: {}]
  %s4 = inlined_call_operand.hbm [shape: bf16[2,2,32,32], index: 4, kind: input, shape index: {}]
  %s5 = inlined_call_operand.hbm [shape: bf16[2,32,32], index: 5, kind: input, shape index: {}]
  %s6 = inlined_call_operand.hbm [shape: bf16[2,32,32], index: 6, kind: input, shape index: {}]
  %s7 = inlined_call_operand.vmem [shape: f32[2,8,32], index: 7, kind: input, shape index: {}]
  %s8 = inlined_call_operand.hbm [shape: bf16[32,128], index: 8, kind: input, shape index: {}]
  %s9 = inlined_call_operand.vmem [shape: f32[1,128], index: 9, kind: input, shape index: {}]
  %s10 = inlined_call_operand.hbm [shape: f32[2,128], index: 10, kind: output, shape index: {}]
  %s11 = sld [smem:[#allocation0]]
  $region113: #{tpu_custom_call.1} parent=0
    _
  %s13 = ssub.s32 1, %s11
  %s14 = scalar_select 0, %s13, %s11
  $region1: #{tpu_custom_call.1} parent=0
    #allocation3 [shape = 'u8[8192]{0}', space=vmem, size = 0x2000, scoped, tag = 'input window, operand 0, single buffered']
    #allocation4 [shape = 's32[2]{0}', space=sflag, size = 0x8, scoped, tag = 'scoped memory for tpu_custom_call.1']
    #allocation5 [shape = 's32[2]{0}', space=sflag, size = 0x8, scoped, tag = 'scoped memory for tpu_custom_call.1']
    #allocation6 [shape = 'u8[32768]{0}', space=vmem, size = 0x8000, scoped, tag = 'input window, operand 1']
    #allocation7 [shape = 's32[2]{0}', space=sflag, size = 0x8, scoped, tag = 'scoped memory for tpu_custom_call.1']
    #allocation8 [shape = 'u8[32768]{0}', space=vmem, size = 0x8000, scoped, tag = 'input window, operand 2']
    #allocation9 [shape = 'u8[32768]{0}', space=vmem, size = 0x8000, scoped, tag = 'input window, operand 3']
    #allocation10 [shape = 's32[2]{0}', space=sflag, size = 0x8, scoped, tag = 'scoped memory for tpu_custom_call.1']
    #allocation11 [shape = 'u8[32768]{0}', space=vmem, size = 0x8000, scoped, tag = 'input window, operand 4']
    #allocation12 [shape = 'u8[16384]{0}', space=vmem, size = 0x4000, scoped, tag = 'input window, operand 5']
    #allocation13 [shape = 's32[2]{0}', space=sflag, size = 0x8, scoped, tag = 'scoped memory for tpu_custom_call.1']
    #allocation14 [shape = 'u8[16384]{0}', space=vmem, size = 0x4000, scoped, tag = 'input window, operand 6']
    #allocation15 [shape = 'u8[8192]{0}', space=vmem, size = 0x2000, scoped, tag = 'input window, operand 8, single buffered']
    #allocation16 [shape = 's32[1]{0}', space=sflag, size = 0x4, scoped, tag = 'scoped memory for tpu_custom_call.1']
    #allocation17 [shape = 'u8[1024]{0}', space=vmem, size = 0x400, scoped, tag = 'output window, operand 0, single buffered']
    %15 = vsyncpa [#allocation4], 0
    %16 = vsyncpa [#allocation7], 0
    %s17 = scalar_lea.sflag [#allocation7], 1
    %18 = vsyncpa %s17, 0
    %19 = vsyncpa [#allocation10], 0
    %s20 = scalar_lea.sflag [#allocation10], 1
    %21 = vsyncpa %s20, 0
    %22 = vsyncpa [#allocation13], 0
    %s23 = scalar_lea.sflag [#allocation13], 1
    %24 = vsyncpa %s23, 0
    %25 = vsyncpa [#allocation16], 0
    %26 = vsyncpa [#allocation5], 0
    loop: start=0, step=1, limit=4
    $region2: #{tpu_custom_call.1} parent=1 // loop_pre_header
      _
    $region3: #{tpu_custom_call.1} parent=1 // loop_header
      %s28 = sphi 0, %s32
      %p29 = scmp.ge.s32.totalorder %s28, 4
      %s35 = sphi 0, %s47
      %s36 = sphi 0, %s43
      %s37 = sphi 0, %s35
      %s38 = sphi 0, %s36
      %s39 = sphi 0, %s37
      %s40 = sphi 0, %s38
      %s50 = sphi 0, %s52
      %s53 = sphi 0, %s50
      %s54 = sphi 0, %s53
      %s70 = sphi 0, %s54
      %s76 = sphi 0, %s78
      %s79 = sphi 0, %s76
      %s80 = sphi 0, %s79
      %s96 = sphi 0, %s80
      %s102 = sphi 0, %s104
      %s105 = sphi 0, %s102
      %s106 = sphi 0, %s105
      %s122 = sphi 0, %s106
      %s128 = sphi 0, %s130
      %s131 = sphi 0, %s128
      %s132 = sphi 0, %s131
      %s148 = sphi 0, %s132
      %s154 = sphi 0, %s156
      %s157 = sphi 0, %s154
      %s158 = sphi 0, %s157
      %s174 = sphi 0, %s158
      %s180 = sphi 0, %s182
      %s183 = sphi 0, %s180
      %s184 = sphi 0, %s183
      %s200 = sphi 0, %s184
      %s206 = sphi 0, %s208
      %s209 = sphi 0, %s206
      %s210 = sphi 0, %s209
      %s226 = sphi 0, %s210
      %s232 = sphi 0, %s234
      %s235 = sphi 0, %s232
      %s236 = sphi 0, %s235
      %s252 = sphi 0, %s236
      %s256 = sphi 0, %s256
      %s258 = sphi 0, %s256
      %s259 = sphi 0, %s258
      %s273 = sphi 0, %s259
      %s277 = sphi 0, %s277
      %s279 = sphi 0, %s277
      %s280 = sphi 0, %s279
      %s294 = sphi 0, %s280
      %s300 = sphi 0, %s302
      %s303 = sphi 0, %s300
      %s304 = sphi 0, %s303
      %s320 = sphi 0, %s304
    $region4: #{tpu_custom_call.1} parent=1 // loop_header_branch
      %31 = sbr.rel (%p29) target = $region8
    $region5: #{tpu_custom_call.1} parent=1 // loop_body
      %s33 = ssub.s32 %s28, 1
      %s34 = ssub.s32 %s28, 2
      %s41 = sadd.s32 1, %s36
      %p42 = scmp.ge.s32.totalorder %s41, 2
      %s43 = scalar_select %p42, 0, %s41
      %s44 = sadd.s32 1, %s35
      %s45 = scalar_select %p42, %s44, %s35
      %p46 = scmp.ge.s32.totalorder %s45, 1
      %s47 = scalar_select %p46, 0, %s45
      %s48 = ssub.s32 %s35, %s47
      %p49 = scmp.eq.s32.totalorder %s48, 0
      %s51 = sadd.s32 %s50, 1
      %s52 = scalar_select %p49, %s50, %s51
      %p55 = pneg %p49
      %p56 = scmp.eq.s32.totalorder %s28, 1
      %p57 = por %p55, %p56
      %p58 = scmp.ne.s32.totalorder %s50, %s53
      %p59 = scmp.eq.s32.totalorder %s28, 0
      %p60 = por %p58, %p59
      %p61 = scmp.ne.s32.totalorder %s50, %s53
      %p62 = scmp.eq.s32.totalorder %s33, 1
      %p63 = por %p61, %p62
      %p64 = scmp.ne.s32.totalorder %s53, %s54
      %p65 = scmp.eq.s32.totalorder %s33, 0
      %p66 = por %p64, %p65
      %p67 = scmp.ne.s32.totalorder %s53, %s54
      %p68 = scmp.eq.s32.totalorder %s34, 1
      %p69 = por %p67, %p68
      %p71 = scmp.ne.s32.totalorder %s54, %s70
      %p72 = scmp.eq.s32.totalorder %s34, 0
      %p73 = por %p71, %p72
      %s74 = ssub.s32 %s36, %s43
      %p75 = scmp.eq.s32.totalorder %s74, 0
      %s77 = sadd.s32 %s76, 1
      %s78 = scalar_select %p75, %s76, %s77
      %p81 = pneg %p75
      %p82 = scmp.eq.s32.totalorder %s28, 1
      %p83 = por %p81, %p82
      %p84 = scmp.ne.s32.totalorder %s76, %s79
      %p85 = scmp.eq.s32.totalorder %s28, 0
      %p86 = por %p84, %p85
      %p87 = scmp.ne.s32.totalorder %s76, %s79
      %p88 = scmp.eq.s32.totalorder %s33, 1
      %p89 = por %p87, %p88
      %p90 = scmp.ne.s32.totalorder %s79, %s80
      %p91 = scmp.eq.s32.totalorder %s33, 0
      %p92 = por %p90, %p91
      %p93 = scmp.ne.s32.totalorder %s79, %s80
      %p94 = scmp.eq.s32.totalorder %s34, 1
      %p95 = por %p93, %p94
      %p97 = scmp.ne.s32.totalorder %s80, %s96
      %p98 = scmp.eq.s32.totalorder %s34, 0
      %p99 = por %p97, %p98
      %s100 = ssub.s32 %s36, %s43
      %p101 = scmp.eq.s32.totalorder %s100, 0
      %s103 = sadd.s32 %s102, 1
      %s104 = scalar_select %p101, %s102, %s103
      %p107 = pneg %p101
      %p108 = scmp.eq.s32.totalorder %s28, 1
      %p109 = por %p107, %p108
      %p110 = scmp.ne.s32.totalorder %s102, %s105
      %p111 = scmp.eq.s32.totalorder %s28, 0
      %p112 = por %p110, %p111
      %p113 = scmp.ne.s32.totalorder %s102, %s105
      %p114 = scmp.eq.s32.totalorder %s33, 1
      %p115 = por %p113, %p114
      %p116 = scmp.ne.s32.totalorder %s105, %s106
      %p117 = scmp.eq.s32.totalorder %s33, 0
      %p118 = por %p116, %p117
      %p119 = scmp.ne.s32.totalorder %s105, %s106
      %p120 = scmp.eq.s32.totalorder %s34, 1
      %p121 = por %p119, %p120
      %p123 = scmp.ne.s32.totalorder %s106, %s122
      %p124 = scmp.eq.s32.totalorder %s34, 0
      %p125 = por %p123, %p124
      %s126 = ssub.s32 %s36, %s43
      %p127 = scmp.eq.s32.totalorder %s126, 0
      %s129 = sadd.s32 %s128, 1
      %s130 = scalar_select %p127, %s128, %s129
      %p133 = pneg %p127
      %p134 = scmp.eq.s32.totalorder %s28, 1
      %p135 = por %p133, %p134
      %p136 = scmp.ne.s32.totalorder %s128, %s131
      %p137 = scmp.eq.s32.totalorder %s28, 0
      %p138 = por %p136, %p137
      %p139 = scmp.ne.s32.totalorder %s128, %s131
      %p140 = scmp.eq.s32.totalorder %s33, 1
      %p141 = por %p139, %p140
      %p142 = scmp.ne.s32.totalorder %s131, %s132
      %p143 = scmp.eq.s32.totalorder %s33, 0
      %p144 = por %p142, %p143
      %p145 = scmp.ne.s32.totalorder %s131, %s132
      %p146 = scmp.eq.s32.totalorder %s34, 1
      %p147 = por %p145, %p146
      %p149 = scmp.ne.s32.totalorder %s132, %s148
      %p150 = scmp.eq.s32.totalorder %s34, 0
      %p151 = por %p149, %p150
      %s152 = ssub.s32 %s36, %s43
      %p153 = scmp.eq.s32.totalorder %s152, 0
      %s155 = sadd.s32 %s154, 1
      %s156 = scalar_select %p153, %s154, %s155
      %p159 = pneg %p153
      %p160 = scmp.eq.s32.totalorder %s28, 1
      %p161 = por %p159, %p160
      %p162 = scmp.ne.s32.totalorder %s154, %s157
      %p163 = scmp.eq.s32.totalorder %s28, 0
      %p164 = por %p162, %p163
      %p165 = scmp.ne.s32.totalorder %s154, %s157
      %p166 = scmp.eq.s32.totalorder %s33, 1
      %p167 = por %p165, %p166
      %p168 = scmp.ne.s32.totalorder %s157, %s158
      %p169 = scmp.eq.s32.totalorder %s33, 0
      %p170 = por %p168, %p169
      %p171 = scmp.ne.s32.totalorder %s157, %s158
      %p172 = scmp.eq.s32.totalorder %s34, 1
      %p173 = por %p171, %p172
      %p175 = scmp.ne.s32.totalorder %s158, %s174
      %p176 = scmp.eq.s32.totalorder %s34, 0
      %p177 = por %p175, %p176
      %s178 = ssub.s32 %s36, %s43
      %p179 = scmp.eq.s32.totalorder %s178, 0
      %s181 = sadd.s32 %s180, 1
      %s182 = scalar_select %p179, %s180, %s181
      %p185 = pneg %p179
      %p186 = scmp.eq.s32.totalorder %s28, 1
      %p187 = por %p185, %p186
      %p188 = scmp.ne.s32.totalorder %s180, %s183
      %p189 = scmp.eq.s32.totalorder %s28, 0
      %p190 = por %p188, %p189
      %p191 = scmp.ne.s32.totalorder %s180, %s183
      %p192 = scmp.eq.s32.totalorder %s33, 1
      %p193 = por %p191, %p192
      %p194 = scmp.ne.s32.totalorder %s183, %s184
      %p195 = scmp.eq.s32.totalorder %s33, 0
      %p196 = por %p194, %p195
      %p197 = scmp.ne.s32.totalorder %s183, %s184
      %p198 = scmp.eq.s32.totalorder %s34, 1
      %p199 = por %p197, %p198
      %p201 = scmp.ne.s32.totalorder %s184, %s200
      %p202 = scmp.eq.s32.totalorder %s34, 0
      %p203 = por %p201, %p202
      %s204 = ssub.s32 %s36, %s43
      %p205 = scmp.eq.s32.totalorder %s204, 0
      %s207 = sadd.s32 %s206, 1
      %s208 = scalar_select %p205, %s206, %s207
      %p211 = pneg %p205
      %p212 = scmp.eq.s32.totalorder %s28, 1
      %p213 = por %p211, %p212
      %p214 = scmp.ne.s32.totalorder %s206, %s209
      %p215 = scmp.eq.s32.totalorder %s28, 0
      %p216 = por %p214, %p215
      %p217 = scmp.ne.s32.totalorder %s206, %s209
      %p218 = scmp.eq.s32.totalorder %s33, 1
      %p219 = por %p217, %p218
      %p220 = scmp.ne.s32.totalorder %s209, %s210
      %p221 = scmp.eq.s32.totalorder %s33, 0
      %p222 = por %p220, %p221
      %p223 = scmp.ne.s32.totalorder %s209, %s210
      %p224 = scmp.eq.s32.totalorder %s34, 1
      %p225 = por %p223, %p224
      %p227 = scmp.ne.s32.totalorder %s210, %s226
      %p228 = scmp.eq.s32.totalorder %s34, 0
      %p229 = por %p227, %p228
      %s230 = ssub.s32 %s36, %s43
      %p231 = scmp.eq.s32.totalorder %s230, 0
      %s233 = sadd.s32 %s232, 1
      %s234 = scalar_select %p231, %s232, %s233
      %p237 = pneg %p231
      %p238 = scmp.eq.s32.totalorder %s28, 1
      %p239 = por %p237, %p238
      %p240 = scmp.ne.s32.totalorder %s232, %s235
      %p241 = scmp.eq.s32.totalorder %s28, 0
      %p242 = por %p240, %p241
      %p243 = scmp.ne.s32.totalorder %s232, %s235
      %p244 = scmp.eq.s32.totalorder %s33, 1
      %p245 = por %p243, %p244
      %p246 = scmp.ne.s32.totalorder %s235, %s236
      %p247 = scmp.eq.s32.totalorder %s33, 0
      %p248 = por %p246, %p247
      %p249 = scmp.ne.s32.totalorder %s235, %s236
      %p250 = scmp.eq.s32.totalorder %s34, 1
      %p251 = por %p249, %p250
      %p253 = scmp.ne.s32.totalorder %s236, %s252
      %p254 = scmp.eq.s32.totalorder %s34, 0
      %p255 = por %p253, %p254
      %s257 = sadd.s32 %s256, 1
      %p260 = scmp.eq.s32.totalorder %s28, 1
      %p261 = scmp.ne.s32.totalorder %s256, %s258
      %p262 = scmp.eq.s32.totalorder %s28, 0
      %p263 = por %p261, %p262
      %p264 = scmp.ne.s32.totalorder %s256, %s258
      %p265 = scmp.eq.s32.totalorder %s33, 1
      %p266 = por %p264, %p265
      %p267 = scmp.ne.s32.totalorder %s258, %s259
      %p268 = scmp.eq.s32.totalorder %s33, 0
      %p269 = por %p267, %p268
      %p270 = scmp.ne.s32.totalorder %s258, %s259
      %p271 = scmp.eq.s32.totalorder %s34, 1
      %p272 = por %p270, %p271
      %p274 = scmp.ne.s32.totalorder %s259, %s273
      %p275 = scmp.eq.s32.totalorder %s34, 0
      %p276 = por %p274, %p275
      %s278 = sadd.s32 %s277, 1
      %p281 = scmp.eq.s32.totalorder %s28, 1
      %p282 = scmp.ne.s32.totalorder %s277, %s279
      %p283 = scmp.eq.s32.totalorder %s28, 0
      %p284 = por %p282, %p283
      %p285 = scmp.ne.s32.totalorder %s277, %s279
      %p286 = scmp.eq.s32.totalorder %s33, 1
      %p287 = por %p285, %p286
      %p288 = scmp.ne.s32.totalorder %s279, %s280
      %p289 = scmp.eq.s32.totalorder %s33, 0
      %p290 = por %p288, %p289
      %p291 = scmp.ne.s32.totalorder %s279, %s280
      %p292 = scmp.eq.s32.totalorder %s34, 1
      %p293 = por %p291, %p292
      %p295 = scmp.ne.s32.totalorder %s280, %s294
      %p296 = scmp.eq.s32.totalorder %s34, 0
      %p297 = por %p295, %p296
      %s298 = ssub.s32 %s35, %s47
      %p299 = scmp.eq.s32.totalorder %s298, 0
      %s301 = sadd.s32 %s300, 1
      %s302 = scalar_select %p299, %s300, %s301
      %p305 = pneg %p299
      %p306 = scmp.eq.s32.totalorder %s28, 1
      %p307 = por %p305, %p306
      %p308 = scmp.ne.s32.totalorder %s300, %s303
      %p309 = scmp.eq.s32.totalorder %s28, 0
      %p310 = por %p308, %p309
      %p311 = scmp.ne.s32.totalorder %s300, %s303
      %p312 = scmp.eq.s32.totalorder %s33, 1
      %p313 = por %p311, %p312
      %p314 = scmp.ne.s32.totalorder %s303, %s304
      %p315 = scmp.eq.s32.totalorder %s33, 0
      %p316 = por %p314, %p315
      %p317 = scmp.ne.s32.totalorder %s303, %s304
      %p318 = scmp.eq.s32.totalorder %s34, 1
      %p319 = por %p317, %p318
      %p321 = scmp.ne.s32.totalorder %s304, %s320
      %p322 = scmp.eq.s32.totalorder %s34, 0
      %p323 = por %p321, %p322
      %p324 = scmp.le.s32.totalorder 1, %s28
      %p325 = scmp.lt.s32.totalorder %s28, 3
      %p326 = pnand %p324, %p325
      %p327 = pneg %p326
      // Predicated region
      $region9: #{tpu_custom_call.1} parent=5 // pred_check
        _
      $region10: #{tpu_custom_call.1} parent=5 // pred_check_branch
        %329 = sbr.rel (%p326) target = $region12
      $region11: #{tpu_custom_call.1} parent=5 // pred_region
        %s330 = ssub.s32 %s28, 1
        // Predicated region
        $region13: #{tpu_custom_call.1} parent=11 // pred_check
          %p331 = pneg %p66
        $region14: #{tpu_custom_call.1} parent=11 // pred_check_branch
          %333 = sbr.rel (%p331) target = $region16
        $region15: #{tpu_custom_call.1} parent=11 // pred_region
          %s334 = smul.u32 2, %s37
          %s336 = ssub.s32 256, 256
          %337 = vsyncadd [#allocation4], %s336
          %s338 = smul.addr %s334, 128
          %s339 = scalar_lea.hbm %s0, %s338
          %s340 = sshll.u32 [#allocation3], 4
          %s341 = int_to_ptr.vmem [resolvable:$true] %s340
          %346 = dma.hbm_to_vmem [thread:$0]  %s339, 256, %s341, [#allocation4], 128, 128, 8
        $region16: #{tpu_custom_call.1} parent=11 // pred_fallthru
          _
        // Predicated region
        $region17: #{tpu_custom_call.1} parent=11 // pred_check
          %p347 = pneg %p269
        $region18: #{tpu_custom_call.1} parent=11 // pred_check_branch
          %349 = sbr.rel (%p347) target = $region20
        $region19: #{tpu_custom_call.1} parent=11 // pred_region
          %s351 = ssub.s32 256, 256
          %352 = vsyncadd [#allocation16], %s351
          %s353 = sshll.u32 [#allocation15], 4
          %s354 = int_to_ptr.vmem [resolvable:$true] %s353
          %359 = dma.hbm_to_vmem [thread:$0]  %s8, 256, %s354, [#allocation16], 64, 64, 4
        $region20: #{tpu_custom_call.1} parent=11 // pred_fallthru
          _
        // Predicated region
        $region21: #{tpu_custom_call.1} parent=11 // pred_check
          %p360 = pneg %p290
        $region22: #{tpu_custom_call.1} parent=11 // pred_check_branch
          %362 = sbr.rel (%p360) target = $region24
        $region23: #{tpu_custom_call.1} parent=11 // pred_region
          _
        $region24: #{tpu_custom_call.1} parent=11 // pred_fallthru
          _
      $region12: #{tpu_custom_call.1} parent=5 // pred_fallthru
        _
      %p363 = scmp.lt.s32.totalorder %s28, 2
      // Predicated region
      $region25: #{tpu_custom_call.1} parent=5 // pred_check
        %p364 = pneg %p363
      $region26: #{tpu_custom_call.1} parent=5 // pred_check_branch
        %366 = sbr.rel (%p364) target = $region28
      $region27: #{tpu_custom_call.1} parent=5 // pred_region
        // Predicated region
        $region29: #{tpu_custom_call.1} parent=27 // pred_check
          %p367 = pneg %p86
        $region30: #{tpu_custom_call.1} parent=27 // pred_check_branch
          %369 = sbr.rel (%p367) target = $region32
        $region31: #{tpu_custom_call.1} parent=27 // pred_region
          %s370 = sand.u32 %s28, 1
          %s371 = scalar_lea.sflag [#allocation7], %s370
          %s372 = sand.u32 %s76, 1
          %s373 = smul.addr %s372, 32
          %s374 = scalar_lea.vmem [#allocation6], %s373
          %s376 = ssub.s32 512, 512
          %377 = vsyncadd %s371, %s376
          %s378 = smul.addr %s36, 8
          %s379 = smul.addr %s378, 64
          %s380 = scalar_lea.hbm %s1, %s379
          %s381 = sshll.u32 %s374, 4
          %s382 = int_to_ptr.vmem [resolvable:$true] %s381
          %387 = dma.hbm_to_vmem [thread:$0]  %s380, 512, %s382, %s371, 64, 64, 4
        $region32: #{tpu_custom_call.1} parent=27 // pred_fallthru
          _
        // Predicated region
        $region33: #{tpu_custom_call.1} parent=27 // pred_check
          %p388 = pneg %p112
        $region34: #{tpu_custom_call.1} parent=27 // pred_check_branch
          %390 = sbr.rel (%p388) target = $region36
        $region35: #{tpu_custom_call.1} parent=27 // pred_region
          %s391 = sand.u32 %s28, 1
          %s392 = scalar_lea.sflag [#allocation7], %s391
          %s393 = sand.u32 %s102, 1
          %s394 = smul.addr %s393, 32
          %s395 = scalar_lea.vmem [#allocation8], %s394
          %s397 = ssub.s32 512, 512
          %398 = vsyncadd %s392, %s397
          %s399 = smul.addr %s36, 8
          %s400 = smul.addr %s399, 64
          %s401 = scalar_lea.hbm %s2, %s400
          %s402 = sshll.u32 %s395, 4
          %s403 = int_to_ptr.vmem [resolvable:$true] %s402
          %408 = dma.hbm_to_vmem [thread:$0]  %s401, 512, %s403, %s392, 64, 64, 4
        $region36: #{tpu_custom_call.1} parent=27 // pred_fallthru
          _
        // Predicated region
        $region37: #{tpu_custom_call.1} parent=27 // pred_check
          %p409 = pneg %p138
        $region38: #{tpu_custom_call.1} parent=27 // pred_check_branch
          %411 = sbr.rel (%p409) target = $region40
        $region39: #{tpu_custom_call.1} parent=27 // pred_region
          %s412 = sand.u32 %s28, 1
          %s413 = scalar_lea.sflag [#allocation10], %s412
          %s414 = sand.u32 %s128, 1
          %s415 = smul.addr %s414, 32
          %s416 = scalar_lea.vmem [#allocation9], %s415
          %s418 = ssub.s32 512, 512
          %419 = vsyncadd %s413, %s418
          %s420 = smul.addr %s36, 8
          %s421 = smul.addr %s420, 64
          %s422 = scalar_lea.hbm %s3, %s421
          %s423 = sshll.u32 %s416, 4
          %s424 = int_to_ptr.vmem [resolvable:$true] %s423
          %429 = dma.hbm_to_vmem [thread:$0]  %s422, 512, %s424, %s413, 64, 64, 4
        $region40: #{tpu_custom_call.1} parent=27 // pred_fallthru
          _
        // Predicated region
        $region41: #{tpu_custom_call.1} parent=27 // pred_check
          %p430 = pneg %p164
        $region42: #{tpu_custom_call.1} parent=27 // pred_check_branch
          %432 = sbr.rel (%p430) target = $region44
        $region43: #{tpu_custom_call.1} parent=27 // pred_region
          %s433 = sand.u32 %s28, 1
          %s434 = scalar_lea.sflag [#allocation10], %s433
          %s435 = sand.u32 %s154, 1
          %s436 = smul.addr %s435, 32
          %s437 = scalar_lea.vmem [#allocation11], %s436
          %s439 = ssub.s32 512, 512
          %440 = vsyncadd %s434, %s439
          %s441 = smul.addr %s36, 8
          %s442 = smul.addr %s441, 64
          %s443 = scalar_lea.hbm %s4, %s442
          %s444 = sshll.u32 %s437, 4
          %s445 = int_to_ptr.vmem [resolvable:$true] %s444
          %450 = dma.hbm_to_vmem [thread:$0]  %s443, 512, %s445, %s434, 64, 64, 4
        $region44: #{tpu_custom_call.1} parent=27 // pred_fallthru
          _
        // Predicated region
        $region45: #{tpu_custom_call.1} parent=27 // pred_check
          %p451 = pneg %p190
        $region46: #{tpu_custom_call.1} parent=27 // pred_check_branch
          %453 = sbr.rel (%p451) target = $region48
        $region47: #{tpu_custom_call.1} parent=27 // pred_region
          %s454 = sand.u32 %s28, 1
          %s455 = scalar_lea.sflag [#allocation13], %s454
          %s456 = sand.u32 %s180, 1
          %s457 = smul.addr %s456, 16
          %s458 = scalar_lea.vmem [#allocation12], %s457
          %s460 = ssub.s32 256, 256
          %461 = vsyncadd %s455, %s460
          %s462 = smul.addr %s36, 4
          %s463 = smul.addr %s462, 64
          %s464 = scalar_lea.hbm %s5, %s463
          %s465 = sshll.u32 %s458, 4
          %s466 = int_to_ptr.vmem [resolvable:$true] %s465
          %471 = dma.hbm_to_vmem [thread:$0]  %s464, 256, %s466, %s455, 64, 64, 4
        $region48: #{tpu_custom_call.1} parent=27 // pred_fallthru
          _
        // Predicated region
        $region49: #{tpu_custom_call.1} parent=27 // pred_check
          %p472 = pneg %p216
        $region50: #{tpu_custom_call.1} parent=27 // pred_check_branch
          %474 = sbr.rel (%p472) target = $region52
        $region51: #{tpu_custom_call.1} parent=27 // pred_region
          %s475 = sand.u32 %s28, 1
          %s476 = scalar_lea.sflag [#allocation13], %s475
          %s477 = sand.u32 %s206, 1
          %s478 = smul.addr %s477, 16
          %s479 = scalar_lea.vmem [#allocation14], %s478
          %s481 = ssub.s32 256, 256
          %482 = vsyncadd %s476, %s481
          %s483 = smul.addr %s36, 4
          %s484 = smul.addr %s483, 64
          %s485 = scalar_lea.hbm %s6, %s484
          %s486 = sshll.u32 %s479, 4
          %s487 = int_to_ptr.vmem [resolvable:$true] %s486
          %492 = dma.hbm_to_vmem [thread:$0]  %s485, 256, %s487, %s476, 64, 64, 4
        $region52: #{tpu_custom_call.1} parent=27 // pred_fallthru
          _
        // Predicated region
        $region53: #{tpu_custom_call.1} parent=27 // pred_check
          %p493 = pneg %p242
        $region54: #{tpu_custom_call.1} parent=27 // pred_check_branch
          %495 = sbr.rel (%p493) target = $region56
        $region55: #{tpu_custom_call.1} parent=27 // pred_region
          %p496 = scmp.lt.s32.totalorder %s36, 1
          %s497 = scalar_select %p496, %s36, 1
          %s498 = smul.addr %s497, 8
          %s499 = scalar_lea.vmem %s7, %s498
        $region56: #{tpu_custom_call.1} parent=27 // pred_fallthru
          _
      $region28: #{tpu_custom_call.1} parent=5 // pred_fallthru
        _
      %p500 = scmp.le.s32.totalorder 1, %s28
      %p501 = scmp.lt.s32.totalorder %s28, 3
      %p502 = pnand %p500, %p501
      %p503 = pneg %p502
      // Predicated region
      $region57: #{tpu_custom_call.1} parent=5 // pred_check
        _
      $region58: #{tpu_custom_call.1} parent=5 // pred_check_branch
        %505 = sbr.rel (%p502) target = $region60
      $region59: #{tpu_custom_call.1} parent=5 // pred_region
        %s506 = ssub.s32 %s28, 1
        // Predicated region
        $region61: #{tpu_custom_call.1} parent=59 // pred_check
          %p507 = pneg %p66
        $region62: #{tpu_custom_call.1} parent=59 // pred_check_branch
          %509 = sbr.rel (%p507) target = $region64
        $region63: #{tpu_custom_call.1} parent=59 // pred_region
          %510 = dma.done [#allocation4], 256
        $region64: #{tpu_custom_call.1} parent=59 // pred_fallthru
          _
        %s511 = sand.u32 %s33, 1
        %s512 = scalar_lea.sflag [#allocation7], %s511
        %s513 = sand.u32 %s79, 1
        %s514 = smul.addr %s513, 32
        %s515 = scalar_lea.vmem [#allocation6], %s514
        // Predicated region
        $region65: #{tpu_custom_call.1} parent=59 // pred_check
          %p516 = pneg %p92
        $region66: #{tpu_custom_call.1} parent=59 // pred_check_branch
          %518 = sbr.rel (%p516) target = $region68
        $region67: #{tpu_custom_call.1} parent=59 // pred_region
          %519 = dma.done %s512, 512
        $region68: #{tpu_custom_call.1} parent=59 // pred_fallthru
          _
        %s520 = sand.u32 %s33, 1
        %s521 = scalar_lea.sflag [#allocation7], %s520
        %s522 = sand.u32 %s105, 1
        %s523 = smul.addr %s522, 32
        %s524 = scalar_lea.vmem [#allocation8], %s523
        // Predicated region
        $region69: #{tpu_custom_call.1} parent=59 // pred_check
          %p525 = pneg %p118
        $region70: #{tpu_custom_call.1} parent=59 // pred_check_branch
          %527 = sbr.rel (%p525) target = $region72
        $region71: #{tpu_custom_call.1} parent=59 // pred_region
          %528 = dma.done %s521, 512
        $region72: #{tpu_custom_call.1} parent=59 // pred_fallthru
          _
        %s529 = sand.u32 %s33, 1
        %s530 = scalar_lea.sflag [#allocation10], %s529
        %s531 = sand.u32 %s131, 1
        %s532 = smul.addr %s531, 32
        %s533 = scalar_lea.vmem [#allocation9], %s532
        // Predicated region
        $region73: #{tpu_custom_call.1} parent=59 // pred_check
          %p534 = pneg %p144
        $region74: #{tpu_custom_call.1} parent=59 // pred_check_branch
          %536 = sbr.rel (%p534) target = $region76
        $region75: #{tpu_custom_call.1} parent=59 // pred_region
          %537 = dma.done %s530, 512
        $region76: #{tpu_custom_call.1} parent=59 // pred_fallthru
          _
        %s538 = sand.u32 %s33, 1
        %s539 = scalar_lea.sflag [#allocation10], %s538
        %s540 = sand.u32 %s157, 1
        %s541 = smul.addr %s540, 32
        %s542 = scalar_lea.vmem [#allocation11], %s541
        // Predicated region
        $region77: #{tpu_custom_call.1} parent=59 // pred_check
          %p543 = pneg %p170
        $region78: #{tpu_custom_call.1} parent=59 // pred_check_branch
          %545 = sbr.rel (%p543) target = $region80
        $region79: #{tpu_custom_call.1} parent=59 // pred_region
          %546 = dma.done %s539, 512
        $region80: #{tpu_custom_call.1} parent=59 // pred_fallthru
          _
        %s547 = sand.u32 %s33, 1
        %s548 = scalar_lea.sflag [#allocation13], %s547
        %s549 = sand.u32 %s183, 1
        %s550 = smul.addr %s549, 16
        %s551 = scalar_lea.vmem [#allocation12], %s550
        // Predicated region
        $region81: #{tpu_custom_call.1} parent=59 // pred_check
          %p552 = pneg %p196
        $region82: #{tpu_custom_call.1} parent=59 // pred_check_branch
          %554 = sbr.rel (%p552) target = $region84
        $region83: #{tpu_custom_call.1} parent=59 // pred_region
          %555 = dma.done %s548, 256
        $region84: #{tpu_custom_call.1} parent=59 // pred_fallthru
          _
        %s556 = sand.u32 %s33, 1
        %s557 = scalar_lea.sflag [#allocation13], %s556
        %s558 = sand.u32 %s209, 1
        %s559 = smul.addr %s558, 16
        %s560 = scalar_lea.vmem [#allocation14], %s559
        // Predicated region
        $region85: #{tpu_custom_call.1} parent=59 // pred_check
          %p561 = pneg %p222
        $region86: #{tpu_custom_call.1} parent=59 // pred_check_branch
          %563 = sbr.rel (%p561) target = $region88
        $region87: #{tpu_custom_call.1} parent=59 // pred_region
          %564 = dma.done %s557, 256
        $region88: #{tpu_custom_call.1} parent=59 // pred_fallthru
          _
        // Predicated region
        $region89: #{tpu_custom_call.1} parent=59 // pred_check
          %p565 = pneg %p269
        $region90: #{tpu_custom_call.1} parent=59 // pred_check_branch
          %567 = sbr.rel (%p565) target = $region92
        $region91: #{tpu_custom_call.1} parent=59 // pred_region
          %568 = dma.done [#allocation16], 256
        $region92: #{tpu_custom_call.1} parent=59 // pred_fallthru
          _
        %p569 = pneg %p66
        %p570 = pneg %p63
        %s571 = sand.u32 %s33, 1
        %s572 = scalar_lea.sflag [#allocation7], %s571
        %s573 = sand.u32 %s79, 1
        %s574 = smul.addr %s573, 32
        %s575 = scalar_lea.vmem [#allocation6], %s574
        %p576 = pneg %p92
        %p577 = pneg %p89
        %s578 = sand.u32 %s33, 1
        %s579 = scalar_lea.sflag [#allocation7], %s578
        %s580 = sand.u32 %s105, 1
        %s581 = smul.addr %s580, 32
        %s582 = scalar_lea.vmem [#allocation8], %s581
        %p583 = pneg %p118
        %p584 = pneg %p115
        %s585 = sand.u32 %s33, 1
        %s586 = scalar_lea.sflag [#allocation10], %s585
        %s587 = sand.u32 %s131, 1
        %s588 = smul.addr %s587, 32
        %s589 = scalar_lea.vmem [#allocation9], %s588
        %p590 = pneg %p144
        %p591 = pneg %p141
        %s592 = sand.u32 %s33, 1
        %s593 = scalar_lea.sflag [#allocation10], %s592
        %s594 = sand.u32 %s157, 1
        %s595 = smul.addr %s594, 32
        %s596 = scalar_lea.vmem [#allocation11], %s595
        %p597 = pneg %p170
        %p598 = pneg %p167
        %s599 = sand.u32 %s33, 1
        %s600 = scalar_lea.sflag [#allocation13], %s599
        %s601 = sand.u32 %s183, 1
        %s602 = smul.addr %s601, 16
        %s603 = scalar_lea.vmem [#allocation12], %s602
        %p604 = pneg %p196
        %p605 = pneg %p193
        %s606 = sand.u32 %s33, 1
        %s607 = scalar_lea.sflag [#allocation13], %s606
        %s608 = sand.u32 %s209, 1
        %s609 = smul.addr %s608, 16
        %s610 = scalar_lea.vmem [#allocation14], %s609
        %p611 = pneg %p222
        %p612 = pneg %p219
        %p613 = scmp.lt.s32.totalorder %s38, 1
        %s614 = scalar_select %p613, %s38, 1
        %s615 = smul.addr %s614, 8
        %s616 = scalar_lea.vmem %s7, %s615
        %p617 = pneg %p248
        %p618 = pneg %p245
        %p619 = pneg %p269
        %p620 = pneg %p266
        %p621 = pneg %p290
        %p622 = pneg %p287
        %p623 = pneg %p316
        %p624 = pneg %p313
        %s625 = smul.u32 2, %s37
        %p626 = scmp.lt.s32.totalorder %s38, 1
        %s627 = scalar_select %p626, %s38, 1
        %s628 = smul.addr %s627, 8
        %s629 = scalar_lea.vmem %s7, %s628
        %p631 = scmp.eq.s32.totalorder %s38, 0
        // Predicated region
        $region93: #{tpu_custom_call.1} parent=59 // pred_check
          %p632 = pneg %p631
        $region94: #{tpu_custom_call.1} parent=59 // pred_check_branch
          %634 = sbr.rel (%p632) target = $region96
        $region95: #{tpu_custom_call.1} parent=59 // pred_region
          %v635 = vld [vmem:[#allocation3] sm:$0xff]
          %v636 = vld [vmem:[#allocation3 + $0x8] sm:$0xff]
          %vm637 = vcmask 261120
          %638 = vst.msk [vmem:[#allocation2] sm:$0xff] %vm637, %v635
          %639 = vst.msk [vmem:[#allocation2 + $0x8] sm:$0xff] %vm637, %v636
        $region96: #{tpu_custom_call.1} parent=59 // pred_fallthru
          _
        %v640 = vld [vmem:[#allocation2] sm:$0xff]
        %v641 = vld [vmem:[#allocation2 + $0x8] sm:$0xff]
        %v642 = vpack.c.bf16 %v641, %v640
        %v643 = vld [vmem:[%s515] sm:$0xf]
        %v644 = vld [vmem:[%s515 + $0x4] sm:$0xf]
        %v645 = vld [vmem:[%s515 + $0x8] sm:$0xf]
        %v646 = vld [vmem:[%s515 + $0xc] sm:$0xf]
        %v647 = vld [vmem:[%s515 + $0x10] sm:$0xf]
        %v648 = vld [vmem:[%s515 + $0x14] sm:$0xf]
        %v649 = vld [vmem:[%s515 + $0x18] sm:$0xf]
        %v650 = vld [vmem:[%s515 + $0x1c] sm:$0xf]
        %v651 = vld [vmem:[%s524] sm:$0xf]
        %v652 = vld [vmem:[%s524 + $0x4] sm:$0xf]
        %v653 = vld [vmem:[%s524 + $0x8] sm:$0xf]
        %v654 = vld [vmem:[%s524 + $0xc] sm:$0xf]
        %v655 = vld [vmem:[%s524 + $0x10] sm:$0xf]
        %v656 = vld [vmem:[%s524 + $0x14] sm:$0xf]
        %v657 = vld [vmem:[%s524 + $0x18] sm:$0xf]
        %v658 = vld [vmem:[%s524 + $0x1c] sm:$0xf]
        %v659 = vld [vmem:[%s533] sm:$0xf]
        %v660 = vld [vmem:[%s533 + $0x4] sm:$0xf]
        %v661 = vld [vmem:[%s533 + $0x8] sm:$0xf]
        %v662 = vld [vmem:[%s533 + $0xc] sm:$0xf]
        %v663 = vld [vmem:[%s533 + $0x10] sm:$0xf]
        %v664 = vld [vmem:[%s533 + $0x14] sm:$0xf]
        %v665 = vld [vmem:[%s533 + $0x18] sm:$0xf]
        %v666 = vld [vmem:[%s533 + $0x1c] sm:$0xf]
        %v667 = vld [vmem:[%s542] sm:$0xf]
        %v668 = vld [vmem:[%s542 + $0x4] sm:$0xf]
        %v669 = vld [vmem:[%s542 + $0x8] sm:$0xf]
        %v670 = vld [vmem:[%s542 + $0xc] sm:$0xf]
        %v671 = vld [vmem:[%s542 + $0x10] sm:$0xf]
        %v672 = vld [vmem:[%s542 + $0x14] sm:$0xf]
        %v673 = vld [vmem:[%s542 + $0x18] sm:$0xf]
        %v674 = vld [vmem:[%s542 + $0x1c] sm:$0xf]
        %v675 = vld [vmem:[%s551] sm:$0xf]
        %v676 = vld [vmem:[%s551 + $0x4] sm:$0xf]
        %v677 = vld [vmem:[%s551 + $0x8] sm:$0xf]
        %v678 = vld [vmem:[%s551 + $0xc] sm:$0xf]
        %v679 = vld [vmem:[%s560] sm:$0xf]
        %v680 = vld [vmem:[%s560 + $0x4] sm:$0xf]
        %v681 = vld [vmem:[%s560 + $0x8] sm:$0xf]
        %v682 = vld [vmem:[%s560 + $0xc] sm:$0xf]
        %v683 = vld [vmem:[%s629] sm:$0xff]
        %v688 = vunpack.c.l.b16 %v643
        %v689 = vunpack.c.l.b16 %v644
        %v690 = vunpack.c.l.b16 %v645
        %v691 = vunpack.c.l.b16 %v646
        %v692 = vpack.c.b16 %v689, %v688
        %v693 = vpack.c.b16 %v691, %v690
        %vm696 = vcmask 261120
        %v698 = vsel %vm696, %v642, 0
        %700 = vmatprep.subr.bf16.mxu0 0
        %701 = vmatpush1.bf16.msra.mxu0 %v692
        %702 = vmatprep.subr.bf16.mxu0 0
        %703 = vmatpush1.bf16.msra.mxu0 %v693
        %704 = vmatprep.subr.bf16.mxu0 0
        %705 = vmatpush1.bf16.msra.mxu0 0
        %706 = vmatprep.subr.bf16.mxu0 0
        %707 = vmatpush1.bf16.msra.mxu0 0
        %708 = vmatprep.subr.bf16.mxu0 0
        %709 = vmatpush1.bf16.msra.mxu0 0
        %710 = vmatprep.subr.bf16.mxu0 0
        %711 = vmatpush1.bf16.msra.mxu0 0
        %712 = vmatprep.subr.bf16.mxu0 0
        %713 = vmatpush1.bf16.msra.mxu0 0
        %714 = vmatprep.subr.bf16.mxu0 0
        %715 = vmatpush1.bf16.msra.mxu0 0
        %716 = vmatprep.subr.bf16.mxu0 0
        %717 = vmatpush1.bf16.msra.mxu0 0
        %718 = vmatprep.subr.bf16.mxu0 0
        %719 = vmatpush1.bf16.msra.mxu0 0
        %720 = vmatprep.subr.bf16.mxu0 0
        %721 = vmatpush1.bf16.msra.mxu0 0
        %722 = vmatprep.subr.bf16.mxu0 0
        %723 = vmatpush1.bf16.msra.mxu0 0
        %724 = vmatprep.subr.bf16.mxu0 0
        %725 = vmatpush1.bf16.msra.mxu0 0
        %726 = vmatprep.subr.bf16.mxu0 0
        %727 = vmatpush1.bf16.msra.mxu0 0
        %728 = vmatprep.subr.bf16.mxu0 0
        %729 = vmatpush1.bf16.msra.mxu0 0
        %730 = vmatprep.subr.bf16.mxu0 0
        %731 = vmatpush1.bf16.msra.mxu0 0
        %732 = vmatprep.mubr.bf16.mxu0 0
        %733 = vmatmul.mubr.bf16.gmra.mrb[0].mxu0 %v698
        %v734 = vpop.f32.mrb[0].mxu0
        %v735 = vadd.f32 0.0, %v734
        %v736 = vpop.f32.mrb[0].mxu0
        %v737 = vpop.f32.mrb[0].mxu0
        %v738 = vadd.f32 0.0, %v737
        %v739 = vpop.f32.mrb[0].mxu0
        %740 = vdwg.mxu0
        %v745 = vunpack.c.l.b16 %v651
        %v746 = vunpack.c.l.b16 %v652
        %v747 = vunpack.c.l.b16 %v653
        %v748 = vunpack.c.l.b16 %v654
        %v749 = vpack.c.b16 %v746, %v745
        %v750 = vpack.c.b16 %v748, %v747
        %753 = vmatprep.subr.bf16.mxu0 0
        %754 = vmatpush1.bf16.msra.mxu0 %v749
        %755 = vmatprep.subr.bf16.mxu0 0
        %756 = vmatpush1.bf16.msra.mxu0 %v750
        %757 = vmatprep.subr.bf16.mxu0 0
        %758 = vmatpush1.bf16.msra.mxu0 0
        %759 = vmatprep.subr.bf16.mxu0 0
        %760 = vmatpush1.bf16.msra.mxu0 0
        %761 = vmatprep.subr.bf16.mxu0 0
        %762 = vmatpush1.bf16.msra.mxu0 0
        %763 = vmatprep.subr.bf16.mxu0 0
        %764 = vmatpush1.bf16.msra.mxu0 0
        %765 = vmatprep.subr.bf16.mxu0 0
        %766 = vmatpush1.bf16.msra.mxu0 0
        %767 = vmatprep.subr.bf16.mxu0 0
        %768 = vmatpush1.bf16.msra.mxu0 0
        %769 = vmatprep.subr.bf16.mxu0 0
        %770 = vmatpush1.bf16.msra.mxu0 0
        %771 = vmatprep.subr.bf16.mxu0 0
        %772 = vmatpush1.bf16.msra.mxu0 0
        %773 = vmatprep.subr.bf16.mxu0 0
        %774 = vmatpush1.bf16.msra.mxu0 0
        %775 = vmatprep.subr.bf16.mxu0 0
        %776 = vmatpush1.bf16.msra.mxu0 0
        %777 = vmatprep.subr.bf16.mxu0 0
        %778 = vmatpush1.bf16.msra.mxu0 0
        %779 = vmatprep.subr.bf16.mxu0 0
        %780 = vmatpush1.bf16.msra.mxu0 0
        %781 = vmatprep.subr.bf16.mxu0 0
        %782 = vmatpush1.bf16.msra.mxu0 0
        %783 = vmatprep.subr.bf16.mxu0 0
        %784 = vmatpush1.bf16.msra.mxu0 0
        %785 = vmatprep.mubr.bf16.mxu0 0
        %786 = vmatmul.mubr.bf16.gmra.mrb[0].mxu0 %v698
        %v787 = vpop.f32.mrb[0].mxu0
        %v788 = vadd.f32 0.0, %v787
        %v789 = vpop.f32.mrb[0].mxu0
        %v790 = vpop.f32.mrb[0].mxu0
        %v791 = vadd.f32 0.0, %v790
        %v792 = vpop.f32.mrb[0].mxu0
        %793 = vdwg.mxu0
        %v798 = vunpack.c.l.b16 %v659
        %v799 = vunpack.c.l.b16 %v660
        %v800 = vunpack.c.l.b16 %v661
        %v801 = vunpack.c.l.b16 %v662
        %v802 = vpack.c.b16 %v799, %v798
        %v803 = vpack.c.b16 %v801, %v800
        %806 = vmatprep.subr.bf16.mxu0 0
        %807 = vmatpush1.bf16.msra.mxu0 %v802
        %808 = vmatprep.subr.bf16.mxu0 0
        %809 = vmatpush1.bf16.msra.mxu0 %v803
        %810 = vmatprep.subr.bf16.mxu0 0
        %811 = vmatpush1.bf16.msra.mxu0 0
        %812 = vmatprep.subr.bf16.mxu0 0
        %813 = vmatpush1.bf16.msra.mxu0 0
        %814 = vmatprep.subr.bf16.mxu0 0
        %815 = vmatpush1.bf16.msra.mxu0 0
        %816 = vmatprep.subr.bf16.mxu0 0
        %817 = vmatpush1.bf16.msra.mxu0 0
        %818 = vmatprep.subr.bf16.mxu0 0
        %819 = vmatpush1.bf16.msra.mxu0 0
        %820 = vmatprep.subr.bf16.mxu0 0
        %821 = vmatpush1.bf16.msra.mxu0 0
        %822 = vmatprep.subr.bf16.mxu0 0
        %823 = vmatpush1.bf16.msra.mxu0 0
        %824 = vmatprep.subr.bf16.mxu0 0
        %825 = vmatpush1.bf16.msra.mxu0 0
        %826 = vmatprep.subr.bf16.mxu0 0
        %827 = vmatpush1.bf16.msra.mxu0 0
        %828 = vmatprep.subr.bf16.mxu0 0
        %829 = vmatpush1.bf16.msra.mxu0 0
        %830 = vmatprep.subr.bf16.mxu0 0
        %831 = vmatpush1.bf16.msra.mxu0 0
        %832 = vmatprep.subr.bf16.mxu0 0
        %833 = vmatpush1.bf16.msra.mxu0 0
        %834 = vmatprep.subr.bf16.mxu0 0
        %835 = vmatpush1.bf16.msra.mxu0 0
        %836 = vmatprep.subr.bf16.mxu0 0
        %837 = vmatpush1.bf16.msra.mxu0 0
        %838 = vmatprep.mubr.bf16.mxu0 0
        %839 = vmatmul.mubr.bf16.gmra.mrb[0].mxu0 %v698
        %v840 = vpop.f32.mrb[0].mxu0
        %v841 = vadd.f32 0.0, %v840
        %v842 = vpop.f32.mrb[0].mxu0
        %v843 = vpop.f32.mrb[0].mxu0
        %v844 = vadd.f32 0.0, %v843
        %v845 = vpop.f32.mrb[0].mxu0
        %846 = vdwg.mxu0
        %v847 = vpack.c.bf16 %v735, %v735
        %v848 = vpack.c.bf16 %v738, %v738
        %v849 = vpack.c.bf16 %v788, %v788
        %v850 = vpack.c.bf16 %v791, %v791
        %v851 = vpack.c.bf16 %v841, %v841
        %v852 = vpack.c.bf16 %v844, %v844
        %v854 = vsel %vm696, %v847, 0
        %v857 = vsel %vm696, %v849, 0
        %859 = vmatprep.subr.bf16.mxu0 0
        %860 = vmatpush1.bf16.xpose.msra.mxu0 %v857
        %861 = vmatprep.subr.bf16.mxu0 0
        %862 = vmatpush1.bf16.xpose.msra.mxu0 0
        %863 = vmatprep.subr.bf16.mxu0 0
        %864 = vmatpush1.bf16.xpose.msra.mxu0 0
        %865 = vmatprep.subr.bf16.mxu0 0
        %866 = vmatpush1.bf16.xpose.msra.mxu0 0
        %867 = vmatprep.subr.bf16.mxu0 0
        %868 = vmatpush1.bf16.xpose.msra.mxu0 0
        %869 = vmatprep.subr.bf16.mxu0 0
        %870 = vmatpush1.bf16.xpose.msra.mxu0 0
        %871 = vmatprep.subr.bf16.mxu0 0
        %872 = vmatpush1.bf16.xpose.msra.mxu0 0
        %873 = vmatprep.subr.bf16.mxu0 0
        %874 = vmatpush1.bf16.xpose.msra.mxu0 0
        %875 = vmatprep.subr.bf16.mxu0 0
        %876 = vmatpush1.bf16.xpose.msra.mxu0 0
        %877 = vmatprep.subr.bf16.mxu0 0
        %878 = vmatpush1.bf16.xpose.msra.mxu0 0
        %879 = vmatprep.subr.bf16.mxu0 0
        %880 = vmatpush1.bf16.xpose.msra.mxu0 0
        %881 = vmatprep.subr.bf16.mxu0 0
        %882 = vmatpush1.bf16.xpose.msra.mxu0 0
        %883 = vmatprep.subr.bf16.mxu0 0
        %884 = vmatpush1.bf16.xpose.msra.mxu0 0
        %885 = vmatprep.subr.bf16.mxu0 0
        %886 = vmatpush1.bf16.xpose.msra.mxu0 0
        %887 = vmatprep.subr.bf16.mxu0 0
        %888 = vmatpush1.bf16.xpose.msra.mxu0 0
        %889 = vmatprep.subr.bf16.mxu0 0
        %890 = vmatpush1.bf16.xpose.msra.mxu0 0
        %891 = vmatprep.mubr.bf16.mxu0 0
        %892 = vmatmul.mubr.bf16.gmra.mrb[0].mxu0 %v854
        %v893 = vpop.f32.mrb[0].mxu0
        %v894 = vadd.f32 0.0, %v893
        %v895 = vpop.f32.mrb[0].mxu0
        %v896 = vpop.f32.mrb[0].mxu0
        %v897 = vpop.f32.mrb[0].mxu0
        %898 = vdwg.mxu0
        %v900 = vsel %vm696, %v848, 0
        %v903 = vsel %vm696, %v850, 0
        %905 = vmatprep.subr.bf16.mxu0 0
        %906 = vmatpush1.bf16.xpose.msra.mxu0 %v903
        %907 = vmatprep.subr.bf16.mxu0 0
        %908 = vmatpush1.bf16.xpose.msra.mxu0 0
        %909 = vmatprep.subr.bf16.mxu0 0
        %910 = vmatpush1.bf16.xpose.msra.mxu0 0
        %911 = vmatprep.subr.bf16.mxu0 0
        %912 = vmatpush1.bf16.xpose.msra.mxu0 0
        %913 = vmatprep.subr.bf16.mxu0 0
        %914 = vmatpush1.bf16.xpose.msra.mxu0 0
        %915 = vmatprep.subr.bf16.mxu0 0
        %916 = vmatpush1.bf16.xpose.msra.mxu0 0
        %917 = vmatprep.subr.bf16.mxu0 0
        %918 = vmatpush1.bf16.xpose.msra.mxu0 0
        %919 = vmatprep.subr.bf16.mxu0 0
        %920 = vmatpush1.bf16.xpose.msra.mxu0 0
        %921 = vmatprep.subr.bf16.mxu0 0
        %922 = vmatpush1.bf16.xpose.msra.mxu0 0
        %923 = vmatprep.subr.bf16.mxu0 0
        %924 = vmatpush1.bf16.xpose.msra.mxu0 0
        %925 = vmatprep.subr.bf16.mxu0 0
        %926 = vmatpush1.bf16.xpose.msra.mxu0 0
        %927 = vmatprep.subr.bf16.mxu0 0
        %928 = vmatpush1.bf16.xpose.msra.mxu0 0
        %929 = vmatprep.subr.bf16.mxu0 0
        %930 = vmatpush1.bf16.xpose.msra.mxu0 0
        %931 = vmatprep.subr.bf16.mxu0 0
        %932 = vmatpush1.bf16.xpose.msra.mxu0 0
        %933 = vmatprep.subr.bf16.mxu0 0
        %934 = vmatpush1.bf16.xpose.msra.mxu0 0
        %935 = vmatprep.subr.bf16.mxu0 0
        %936 = vmatpush1.bf16.xpose.msra.mxu0 0
        %937 = vmatprep.mubr.bf16.mxu0 0
        %938 = vmatmul.mubr.bf16.gmra.mrb[0].mxu0 %v900
        %v939 = vpop.f32.mrb[0].mxu0
        %v940 = vadd.f32 0.0, %v939
        %v941 = vpop.f32.mrb[0].mxu0
        %v942 = vpop.f32.mrb[0].mxu0
        %v943 = vpop.f32.mrb[0].mxu0
        %944 = vdwg.mxu0
        %vm945 = vcmask 64512
        %v946 = vsel %vm945, %v894, -inf
        %947 = vmax.xlane.f32.xlu0 %v946
        %v948 = vpop.xlane.xlu0 %947
        %v949 = vsel %vm945, %v940, -inf
        %950 = vmax.xlane.f32.xlu0 %v949
        %v951 = vpop.xlane.xlu0 %950
        %v952 = vsub.f32 %v894, %v948
        %v953 = vsub.f32 %v940, %v951
        %v954 = vmul.f32 %v952, 1.442695
        %v955 = vpow.pop %v954
        %v956 = vmul.f32 %v953, 1.442695
        %v957 = vpow.pop %v956
        %v958 = vsel %vm945, %v955, 0.0
        %959 = vadd.xlane.f32.xlu0 %v958
        %v960 = vpop.xlane.xlu0 %959
        %v961 = vsel %vm945, %v957, 0.0
        %962 = vadd.xlane.f32.xlu0 %v961
        %v963 = vpop.xlane.xlu0 %962
        %v964 = vrcp.pop %v960
        %v965 = vrcp.pop %v963
        %v966 = vmul.f32 %v955, %v964
        %v967 = vmul.f32 %v957, %v965
        %v968 = vpack.c.bf16 %v966, %v966
        %v969 = vpack.c.bf16 %v967, %v967
        %v971 = vsel %vm945, %v968, 0
        %vm973 = vcmask 1043456
        %v975 = vsel %vm973, %v851, 0
        %977 = vmatprep.subr.bf16.mxu0 0
        %978 = vmatpush1.bf16.msra.mxu0 %v975
        %979 = vmatprep.subr.bf16.mxu0 0
        %980 = vmatpush1.bf16.msra.mxu0 0
        %981 = vmatprep.subr.bf16.mxu0 0
        %982 = vmatpush1.bf16.msra.mxu0 0
        %983 = vmatprep.subr.bf16.mxu0 0
        %984 = vmatpush1.bf16.msra.mxu0 0
        %985 = vmatprep.subr.bf16.mxu0 0
        %986 = vmatpush1.bf16.msra.mxu0 0
        %987 = vmatprep.subr.bf16.mxu0 0
        %988 = vmatpush1.bf16.msra.mxu0 0
        %989 = vmatprep.subr.bf16.mxu0 0
        %990 = vmatpush1.bf16.msra.mxu0 0
        %991 = vmatprep.subr.bf16.mxu0 0
        %992 = vmatpush1.bf16.msra.mxu0 0
        %993 = vmatprep.subr.bf16.mxu0 0
        %994 = vmatpush1.bf16.msra.mxu0 0
        %995 = vmatprep.subr.bf16.mxu0 0
        %996 = vmatpush1.bf16.msra.mxu0 0
        %997 = vmatprep.subr.bf16.mxu0 0
        %998 = vmatpush1.bf16.msra.mxu0 0
        %999 = vmatprep.subr.bf16.mxu0 0
        %1000 = vmatpush1.bf16.msra.mxu0 0
        %1001 = vmatprep.subr.bf16.mxu0 0
        %1002 = vmatpush1.bf16.msra.mxu0 0
        %1003 = vmatprep.subr.bf16.mxu0 0
        %1004 = vmatpush1.bf16.msra.mxu0 0
        %1005 = vmatprep.subr.bf16.mxu0 0
        %1006 = vmatpush1.bf16.msra.mxu0 0
        %1007 = vmatprep.subr.bf16.mxu0 0
        %1008 = vmatpush1.bf16.msra.mxu0 0
        %1009 = vmatprep.mubr.bf16.mxu0 0
        %1010 = vmatmul.mubr.bf16.gmra.mrb[0].mxu0 %v971
        %v1011 = vpop.f32.mrb[0].mxu0
        %v1012 = vadd.f32 0.0, %v1011
        %v1013 = vpop.f32.mrb[0].mxu0
        %v1014 = vpop.f32.mrb[0].mxu0
        %v1015 = vpop.f32.mrb[0].mxu0
        %1016 = vdwg.mxu0
        %v1018 = vsel %vm945, %v969, 0
        %v1021 = vsel %vm973, %v852, 0
        %1023 = vmatprep.subr.bf16.mxu0 0
        %1024 = vmatpush1.bf16.msra.mxu0 %v1021
        %1025 = vmatprep.subr.bf16.mxu0 0
        %1026 = vmatpush1.bf16.msra.mxu0 0
        %1027 = vmatprep.subr.bf16.mxu0 0
        %1028 = vmatpush1.bf16.msra.mxu0 0
        %1029 = vmatprep.subr.bf16.mxu0 0
        %1030 = vmatpush1.bf16.msra.mxu0 0
        %1031 = vmatprep.subr.bf16.mxu0 0
        %1032 = vmatpush1.bf16.msra.mxu0 0
        %1033 = vmatprep.subr.bf16.mxu0 0
        %1034 = vmatpush1.bf16.msra.mxu0 0
        %1035 = vmatprep.subr.bf16.mxu0 0
        %1036 = vmatpush1.bf16.msra.mxu0 0
        %1037 = vmatprep.subr.bf16.mxu0 0
        %1038 = vmatpush1.bf16.msra.mxu0 0
        %1039 = vmatprep.subr.bf16.mxu0 0
        %1040 = vmatpush1.bf16.msra.mxu0 0
        %1041 = vmatprep.subr.bf16.mxu0 0
        %1042 = vmatpush1.bf16.msra.mxu0 0
        %1043 = vmatprep.subr.bf16.mxu0 0
        %1044 = vmatpush1.bf16.msra.mxu0 0
        %1045 = vmatprep.subr.bf16.mxu0 0
        %1046 = vmatpush1.bf16.msra.mxu0 0
        %1047 = vmatprep.subr.bf16.mxu0 0
        %1048 = vmatpush1.bf16.msra.mxu0 0
        %1049 = vmatprep.subr.bf16.mxu0 0
        %1050 = vmatpush1.bf16.msra.mxu0 0
        %1051 = vmatprep.subr.bf16.mxu0 0
        %1052 = vmatpush1.bf16.msra.mxu0 0
        %1053 = vmatprep.subr.bf16.mxu0 0
        %1054 = vmatpush1.bf16.msra.mxu0 0
        %1055 = vmatprep.mubr.bf16.mxu0 0
        %1056 = vmatmul.mubr.bf16.gmra.mrb[0].mxu0 %v1018
        %v1057 = vpop.f32.mrb[0].mxu0
        %v1058 = vadd.f32 0.0, %v1057
        %v1059 = vpop.f32.mrb[0].mxu0
        %v1060 = vpop.f32.mrb[0].mxu0
        %v1061 = vpop.f32.mrb[0].mxu0
        %1062 = vdwg.mxu0
        %v1063 = vpack.c.bf16 %v1058, %v1012
        %v1068 = vunpack.c.l.b16 %v647
        %v1069 = vunpack.c.l.b16 %v648
        %v1070 = vunpack.c.l.b16 %v649
        %v1071 = vunpack.c.l.b16 %v650
        %v1072 = vpack.c.b16 %v1069, %v1068
        %v1073 = vpack.c.b16 %v1071, %v1070
        %1076 = vmatprep.subr.bf16.mxu0 0
        %1077 = vmatpush1.bf16.msra.mxu0 %v1072
        %1078 = vmatprep.subr.bf16.mxu0 0
        %1079 = vmatpush1.bf16.msra.mxu0 %v1073
        %1080 = vmatprep.subr.bf16.mxu0 0
        %1081 = vmatpush1.bf16.msra.mxu0 0
        %1082 = vmatprep.subr.bf16.mxu0 0
        %1083 = vmatpush1.bf16.msra.mxu0 0
        %1084 = vmatprep.subr.bf16.mxu0 0
        %1085 = vmatpush1.bf16.msra.mxu0 0
        %1086 = vmatprep.subr.bf16.mxu0 0
        %1087 = vmatpush1.bf16.msra.mxu0 0
        %1088 = vmatprep.subr.bf16.mxu0 0
        %1089 = vmatpush1.bf16.msra.mxu0 0
        %1090 = vmatprep.subr.bf16.mxu0 0
        %1091 = vmatpush1.bf16.msra.mxu0 0
        %1092 = vmatprep.subr.bf16.mxu0 0
        %1093 = vmatpush1.bf16.msra.mxu0 0
        %1094 = vmatprep.subr.bf16.mxu0 0
        %1095 = vmatpush1.bf16.msra.mxu0 0
        %1096 = vmatprep.subr.bf16.mxu0 0
        %1097 = vmatpush1.bf16.msra.mxu0 0
        %1098 = vmatprep.subr.bf16.mxu0 0
        %1099 = vmatpush1.bf16.msra.mxu0 0
        %1100 = vmatprep.subr.bf16.mxu0 0
        %1101 = vmatpush1.bf16.msra.mxu0 0
        %1102 = vmatprep.subr.bf16.mxu0 0
        %1103 = vmatpush1.bf16.msra.mxu0 0
        %1104 = vmatprep.subr.bf16.mxu0 0
        %1105 = vmatpush1.bf16.msra.mxu0 0
        %1106 = vmatprep.subr.bf16.mxu0 0
        %1107 = vmatpush1.bf16.msra.mxu0 0
        %1108 = vmatprep.mubr.bf16.mxu0 0
        %1109 = vmatmul.mubr.bf16.gmra.mrb[0].mxu0 %v698
        %v1110 = vpop.f32.mrb[0].mxu0
        %v1111 = vadd.f32 0.0, %v1110
        %v1112 = vpop.f32.mrb[0].mxu0
        %v1113 = vpop.f32.mrb[0].mxu0
        %v1114 = vadd.f32 0.0, %v1113
        %v1115 = vpop.f32.mrb[0].mxu0
        %1116 = vdwg.mxu0
        %v1121 = vunpack.c.l.b16 %v655
        %v1122 = vunpack.c.l.b16 %v656
        %v1123 = vunpack.c.l.b16 %v657
        %v1124 = vunpack.c.l.b16 %v658
        %v1125 = vpack.c.b16 %v1122, %v1121
        %v1126 = vpack.c.b16 %v1124, %v1123
        %1129 = vmatprep.subr.bf16.mxu0 0
        %1130 = vmatpush1.bf16.msra.mxu0 %v1125
        %1131 = vmatprep.subr.bf16.mxu0 0
        %1132 = vmatpush1.bf16.msra.mxu0 %v1126
        %1133 = vmatprep.subr.bf16.mxu0 0
        %1134 = vmatpush1.bf16.msra.mxu0 0
        %1135 = vmatprep.subr.bf16.mxu0 0
        %1136 = vmatpush1.bf16.msra.mxu0 0
        %1137 = vmatprep.subr.bf16.mxu0 0
        %1138 = vmatpush1.bf16.msra.mxu0 0
        %1139 = vmatprep.subr.bf16.mxu0 0
        %1140 = vmatpush1.bf16.msra.mxu0 0
        %1141 = vmatprep.subr.bf16.mxu0 0
        %1142 = vmatpush1.bf16.msra.mxu0 0
        %1143 = vmatprep.subr.bf16.mxu0 0
        %1144 = vmatpush1.bf16.msra.mxu0 0
        %1145 = vmatprep.subr.bf16.mxu0 0
        %1146 = vmatpush1.bf16.msra.mxu0 0
        %1147 = vmatprep.subr.bf16.mxu0 0
        %1148 = vmatpush1.bf16.msra.mxu0 0
        %1149 = vmatprep.subr.bf16.mxu0 0
        %1150 = vmatpush1.bf16.msra.mxu0 0
        %1151 = vmatprep.subr.bf16.mxu0 0
        %1152 = vmatpush1.bf16.msra.mxu0 0
        %1153 = vmatprep.subr.bf16.mxu0 0
        %1154 = vmatpush1.bf16.msra.mxu0 0
        %1155 = vmatprep.subr.bf16.mxu0 0
        %1156 = vmatpush1.bf16.msra.mxu0 0
        %1157 = vmatprep.subr.bf16.mxu0 0
        %1158 = vmatpush1.bf16.msra.mxu0 0
        %1159 = vmatprep.subr.bf16.mxu0 0
        %1160 = vmatpush1.bf16.msra.mxu0 0
        %1161 = vmatprep.mubr.bf16.mxu0 0
        %1162 = vmatmul.mubr.bf16.gmra.mrb[0].mxu0 %v698
        %v1163 = vpop.f32.mrb[0].mxu0
        %v1164 = vadd.f32 0.0, %v1163
        %v1165 = vpop.f32.mrb[0].mxu0
        %v1166 = vpop.f32.mrb[0].mxu0
        %v1167 = vadd.f32 0.0, %v1166
        %v1168 = vpop.f32.mrb[0].mxu0
        %1169 = vdwg.mxu0
        %v1174 = vunpack.c.l.b16 %v663
        %v1175 = vunpack.c.l.b16 %v664
        %v1176 = vunpack.c.l.b16 %v665
        %v1177 = vunpack.c.l.b16 %v666
        %v1178 = vpack.c.b16 %v1175, %v1174
        %v1179 = vpack.c.b16 %v1177, %v1176
        %1182 = vmatprep.subr.bf16.mxu0 0
        %1183 = vmatpush1.bf16.msra.mxu0 %v1178
        %1184 = vmatprep.subr.bf16.mxu0 0
        %1185 = vmatpush1.bf16.msra.mxu0 %v1179
        %1186 = vmatprep.subr.bf16.mxu0 0
        %1187 = vmatpush1.bf16.msra.mxu0 0
        %1188 = vmatprep.subr.bf16.mxu0 0
        %1189 = vmatpush1.bf16.msra.mxu0 0
        %1190 = vmatprep.subr.bf16.mxu0 0
        %1191 = vmatpush1.bf16.msra.mxu0 0
        %1192 = vmatprep.subr.bf16.mxu0 0
        %1193 = vmatpush1.bf16.msra.mxu0 0
        %1194 = vmatprep.subr.bf16.mxu0 0
        %1195 = vmatpush1.bf16.msra.mxu0 0
        %1196 = vmatprep.subr.bf16.mxu0 0
        %1197 = vmatpush1.bf16.msra.mxu0 0
        %1198 = vmatprep.subr.bf16.mxu0 0
        %1199 = vmatpush1.bf16.msra.mxu0 0
        %1200 = vmatprep.subr.bf16.mxu0 0
        %1201 = vmatpush1.bf16.msra.mxu0 0
        %1202 = vmatprep.subr.bf16.mxu0 0
        %1203 = vmatpush1.bf16.msra.mxu0 0
        %1204 = vmatprep.subr.bf16.mxu0 0
        %1205 = vmatpush1.bf16.msra.mxu0 0
        %1206 = vmatprep.subr.bf16.mxu0 0
        %1207 = vmatpush1.bf16.msra.mxu0 0
        %1208 = vmatprep.subr.bf16.mxu0 0
        %1209 = vmatpush1.bf16.msra.mxu0 0
        %1210 = vmatprep.subr.bf16.mxu0 0
        %1211 = vmatpush1.bf16.msra.mxu0 0
        %1212 = vmatprep.subr.bf16.mxu0 0
        %1213 = vmatpush1.bf16.msra.mxu0 0
        %1214 = vmatprep.mubr.bf16.mxu0 0
        %1215 = vmatmul.mubr.bf16.gmra.mrb[0].mxu0 %v698
        %v1216 = vpop.f32.mrb[0].mxu0
        %v1217 = vadd.f32 0.0, %v1216
        %v1218 = vpop.f32.mrb[0].mxu0
        %v1219 = vpop.f32.mrb[0].mxu0
        %v1220 = vadd.f32 0.0, %v1219
        %v1221 = vpop.f32.mrb[0].mxu0
        %1222 = vdwg.mxu0
        %v1223 = vpack.c.bf16 %v1111, %v1111
        %v1224 = vpack.c.bf16 %v1114, %v1114
        %v1225 = vpack.c.bf16 %v1164, %v1164
        %v1226 = vpack.c.bf16 %v1167, %v1167
        %v1227 = vpack.c.bf16 %v1217, %v1217
        %v1228 = vpack.c.bf16 %v1220, %v1220
        %v1230 = vsel %vm696, %v1223, 0
        %v1233 = vsel %vm696, %v1225, 0
        %1235 = vmatprep.subr.bf16.mxu0 0
        %1236 = vmatpush1.bf16.xpose.msra.mxu0 %v1233
        %1237 = vmatprep.subr.bf16.mxu0 0
        %1238 = vmatpush1.bf16.xpose.msra.mxu0 0
        %1239 = vmatprep.subr.bf16.mxu0 0
        %1240 = vmatpush1.bf16.xpose.msra.mxu0 0
        %1241 = vmatprep.subr.bf16.mxu0 0
        %1242 = vmatpush1.bf16.xpose.msra.mxu0 0
        %1243 = vmatprep.subr.bf16.mxu0 0
        %1244 = vmatpush1.bf16.xpose.msra.mxu0 0
        %1245 = vmatprep.subr.bf16.mxu0 0
        %1246 = vmatpush1.bf16.xpose.msra.mxu0 0
        %1247 = vmatprep.subr.bf16.mxu0 0
        %1248 = vmatpush1.bf16.xpose.msra.mxu0 0
        %1249 = vmatprep.subr.bf16.mxu0 0
        %1250 = vmatpush1.bf16.xpose.msra.mxu0 0
        %1251 = vmatprep.subr.bf16.mxu0 0
        %1252 = vmatpush1.bf16.xpose.msra.mxu0 0
        %1253 = vmatprep.subr.bf16.mxu0 0
        %1254 = vmatpush1.bf16.xpose.msra.mxu0 0
        %1255 = vmatprep.subr.bf16.mxu0 0
        %1256 = vmatpush1.bf16.xpose.msra.mxu0 0
        %1257 = vmatprep.subr.bf16.mxu0 0
        %1258 = vmatpush1.bf16.xpose.msra.mxu0 0
        %1259 = vmatprep.subr.bf16.mxu0 0
        %1260 = vmatpush1.bf16.xpose.msra.mxu0 0
        %1261 = vmatprep.subr.bf16.mxu0 0
        %1262 = vmatpush1.bf16.xpose.msra.mxu0 0
        %1263 = vmatprep.subr.bf16.mxu0 0
        %1264 = vmatpush1.bf16.xpose.msra.mxu0 0
        %1265 = vmatprep.subr.bf16.mxu0 0
        %1266 = vmatpush1.bf16.xpose.msra.mxu0 0
        %1267 = vmatprep.mubr.bf16.mxu0 0
        %1268 = vmatmul.mubr.bf16.gmra.mrb[0].mxu0 %v1230
        %v1269 = vpop.f32.mrb[0].mxu0
        %v1270 = vadd.f32 0.0, %v1269
        %v1271 = vpop.f32.mrb[0].mxu0
        %v1272 = vpop.f32.mrb[0].mxu0
        %v1273 = vpop.f32.mrb[0].mxu0
        %1274 = vdwg.mxu0
        %v1276 = vsel %vm696, %v1224, 0
        %v1279 = vsel %vm696, %v1226, 0
        %1281 = vmatprep.subr.bf16.mxu0 0
        %1282 = vmatpush1.bf16.xpose.msra.mxu0 %v1279
        %1283 = vmatprep.subr.bf16.mxu0 0
        %1284 = vmatpush1.bf16.xpose.msra.mxu0 0
        %1285 = vmatprep.subr.bf16.mxu0 0
        %1286 = vmatpush1.bf16.xpose.msra.mxu0 0
        %1287 = vmatprep.subr.bf16.mxu0 0
        %1288 = vmatpush1.bf16.xpose.msra.mxu0 0
        %1289 = vmatprep.subr.bf16.mxu0 0
        %1290 = vmatpush1.bf16.xpose.msra.mxu0 0
        %1291 = vmatprep.subr.bf16.mxu0 0
        %1292 = vmatpush1.bf16.xpose.msra.mxu0 0
        %1293 = vmatprep.subr.bf16.mxu0 0
        %1294 = vmatpush1.bf16.xpose.msra.mxu0 0
        %1295 = vmatprep.subr.bf16.mxu0 0
        %1296 = vmatpush1.bf16.xpose.msra.mxu0 0
        %1297 = vmatprep.subr.bf16.mxu0 0
        %1298 = vmatpush1.bf16.xpose.msra.mxu0 0
        %1299 = vmatprep.subr.bf16.mxu0 0
        %1300 = vmatpush1.bf16.xpose.msra.mxu0 0
        %1301 = vmatprep.subr.bf16.mxu0 0
        %1302 = vmatpush1.bf16.xpose.msra.mxu0 0
        %1303 = vmatprep.subr.bf16.mxu0 0
        %1304 = vmatpush1.bf16.xpose.msra.mxu0 0
        %1305 = vmatprep.subr.bf16.mxu0 0
        %1306 = vmatpush1.bf16.xpose.msra.mxu0 0
        %1307 = vmatprep.subr.bf16.mxu0 0
        %1308 = vmatpush1.bf16.xpose.msra.mxu0 0
        %1309 = vmatprep.subr.bf16.mxu0 0
        %1310 = vmatpush1.bf16.xpose.msra.mxu0 0
        %1311 = vmatprep.subr.bf16.mxu0 0
        %1312 = vmatpush1.bf16.xpose.msra.mxu0 0
        %1313 = vmatprep.mubr.bf16.mxu0 0
        %1314 = vmatmul.mubr.bf16.gmra.mrb[0].mxu0 %v1276
        %v1315 = vpop.f32.mrb[0].mxu0
        %v1316 = vadd.f32 0.0, %v1315
        %v1317 = vpop.f32.mrb[0].mxu0
        %v1318 = vpop.f32.mrb[0].mxu0
        %v1319 = vpop.f32.mrb[0].mxu0
        %1320 = vdwg.mxu0
        %v1321 = vsel %vm945, %v1270, -inf
        %1322 = vmax.xlane.f32.xlu0 %v1321
        %v1323 = vpop.xlane.xlu0 %1322
        %v1324 = vsel %vm945, %v1316, -inf
        %1325 = vmax.xlane.f32.xlu0 %v1324
        %v1326 = vpop.xlane.xlu0 %1325
        %v1327 = vsub.f32 %v1270, %v1323
        %v1328 = vsub.f32 %v1316, %v1326
        %v1329 = vmul.f32 %v1327, 1.442695
        %v1330 = vpow.pop %v1329
        %v1331 = vmul.f32 %v1328, 1.442695
        %v1332 = vpow.pop %v1331
        %v1333 = vsel %vm945, %v1330, 0.0
        %1334 = vadd.xlane.f32.xlu0 %v1333
        %v1335 = vpop.xlane.xlu0 %1334
        %v1336 = vsel %vm945, %v1332, 0.0
        %1337 = vadd.xlane.f32.xlu0 %v1336
        %v1338 = vpop.xlane.xlu0 %1337
        %v1339 = vrcp.pop %v1335
        %v1340 = vrcp.pop %v1338
        %v1341 = vmul.f32 %v1330, %v1339
        %v1342 = vmul.f32 %v1332, %v1340
        %v1343 = vpack.c.bf16 %v1341, %v1341
        %v1344 = vpack.c.bf16 %v1342, %v1342
        %v1346 = vsel %vm945, %v1343, 0
        %v1349 = vsel %vm973, %v1227, 0
        %1351 = vmatprep.subr.bf16.mxu0 0
        %1352 = vmatpush1.bf16.msra.mxu0 %v1349
        %1353 = vmatprep.subr.bf16.mxu0 0
        %1354 = vmatpush1.bf16.msra.mxu0 0
        %1355 = vmatprep.subr.bf16.mxu0 0
        %1356 = vmatpush1.bf16.msra.mxu0 0
        %1357 = vmatprep.subr.bf16.mxu0 0
        %1358 = vmatpush1.bf16.msra.mxu0 0
        %1359 = vmatprep.subr.bf16.mxu0 0
        %1360 = vmatpush1.bf16.msra.mxu0 0
        %1361 = vmatprep.subr.bf16.mxu0 0
        %1362 = vmatpush1.bf16.msra.mxu0 0
        %1363 = vmatprep.subr.bf16.mxu0 0
        %1364 = vmatpush1.bf16.msra.mxu0 0
        %1365 = vmatprep.subr.bf16.mxu0 0
        %1366 = vmatpush1.bf16.msra.mxu0 0
        %1367 = vmatprep.subr.bf16.mxu0 0
        %1368 = vmatpush1.bf16.msra.mxu0 0
        %1369 = vmatprep.subr.bf16.mxu0 0
        %1370 = vmatpush1.bf16.msra.mxu0 0
        %1371 = vmatprep.subr.bf16.mxu0 0
        %1372 = vmatpush1.bf16.msra.mxu0 0
        %1373 = vmatprep.subr.bf16.mxu0 0
        %1374 = vmatpush1.bf16.msra.mxu0 0
        %1375 = vmatprep.subr.bf16.mxu0 0
        %1376 = vmatpush1.bf16.msra.mxu0 0
        %1377 = vmatprep.subr.bf16.mxu0 0
        %1378 = vmatpush1.bf16.msra.mxu0 0
        %1379 = vmatprep.subr.bf16.mxu0 0
        %1380 = vmatpush1.bf16.msra.mxu0 0
        %1381 = vmatprep.subr.bf16.mxu0 0
        %1382 = vmatpush1.bf16.msra.mxu0 0
        %1383 = vmatprep.mubr.bf16.mxu0 0
        %1384 = vmatmul.mubr.bf16.gmra.mrb[0].mxu0 %v1346
        %v1385 = vpop.f32.mrb[0].mxu0
        %v1386 = vadd.f32 0.0, %v1385
        %v1387 = vpop.f32.mrb[0].mxu0
        %v1388 = vpop.f32.mrb[0].mxu0
        %v1389 = vpop.f32.mrb[0].mxu0
        %1390 = vdwg.mxu0
        %v1392 = vsel %vm945, %v1344, 0
        %v1395 = vsel %vm973, %v1228, 0
        %1397 = vmatprep.subr.bf16.mxu0 0
        %1398 = vmatpush1.bf16.msra.mxu0 %v1395
        %1399 = vmatprep.subr.bf16.mxu0 0
        %1400 = vmatpush1.bf16.msra.mxu0 0
        %1401 = vmatprep.subr.bf16.mxu0 0
        %1402 = vmatpush1.bf16.msra.mxu0 0
        %1403 = vmatprep.subr.bf16.mxu0 0
        %1404 = vmatpush1.bf16.msra.mxu0 0
        %1405 = vmatprep.subr.bf16.mxu0 0
        %1406 = vmatpush1.bf16.msra.mxu0 0
        %1407 = vmatprep.subr.bf16.mxu0 0
        %1408 = vmatpush1.bf16.msra.mxu0 0
        %1409 = vmatprep.subr.bf16.mxu0 0
        %1410 = vmatpush1.bf16.msra.mxu0 0
        %1411 = vmatprep.subr.bf16.mxu0 0
        %1412 = vmatpush1.bf16.msra.mxu0 0
        %1413 = vmatprep.subr.bf16.mxu0 0
        %1414 = vmatpush1.bf16.msra.mxu0 0
        %1415 = vmatprep.subr.bf16.mxu0 0
        %1416 = vmatpush1.bf16.msra.mxu0 0
        %1417 = vmatprep.subr.bf16.mxu0 0
        %1418 = vmatpush1.bf16.msra.mxu0 0
        %1419 = vmatprep.subr.bf16.mxu0 0
        %1420 = vmatpush1.bf16.msra.mxu0 0
        %1421 = vmatprep.subr.bf16.mxu0 0
        %1422 = vmatpush1.bf16.msra.mxu0 0
        %1423 = vmatprep.subr.bf16.mxu0 0
        %1424 = vmatpush1.bf16.msra.mxu0 0
        %1425 = vmatprep.subr.bf16.mxu0 0
        %1426 = vmatpush1.bf16.msra.mxu0 0
        %1427 = vmatprep.subr.bf16.mxu0 0
        %1428 = vmatpush1.bf16.msra.mxu0 0
        %1429 = vmatprep.mubr.bf16.mxu0 0
        %1430 = vmatmul.mubr.bf16.gmra.mrb[0].mxu0 %v1392
        %v1431 = vpop.f32.mrb[0].mxu0
        %v1432 = vadd.f32 0.0, %v1431
        %v1433 = vpop.f32.mrb[0].mxu0
        %v1434 = vpop.f32.mrb[0].mxu0
        %v1435 = vpop.f32.mrb[0].mxu0
        %1436 = vdwg.mxu0
        %v1437 = vpack.c.bf16 %v1432, %v1386
        %v1442 = vunpack.c.l.b16 %v671
        %v1443 = vunpack.c.l.b16 %v672
        %v1444 = vunpack.c.l.b16 %v673
        %v1445 = vunpack.c.l.b16 %v674
        %v1446 = vpack.c.b16 %v1443, %v1442
        %v1447 = vpack.c.b16 %v1445, %v1444
        %v1451 = vsel %vm696, %v1437, 0
        %1453 = vmatprep.subr.bf16.mxu0 0
        %1454 = vmatpush1.bf16.msra.mxu0 %v1446
        %1455 = vmatprep.subr.bf16.mxu0 0
        %1456 = vmatpush1.bf16.msra.mxu0 %v1447
        %1457 = vmatprep.subr.bf16.mxu0 0
        %1458 = vmatpush1.bf16.msra.mxu0 0
        %1459 = vmatprep.subr.bf16.mxu0 0
        %1460 = vmatpush1.bf16.msra.mxu0 0
        %1461 = vmatprep.subr.bf16.mxu0 0
        %1462 = vmatpush1.bf16.msra.mxu0 0
        %1463 = vmatprep.subr.bf16.mxu0 0
        %1464 = vmatpush1.bf16.msra.mxu0 0
        %1465 = vmatprep.subr.bf16.mxu0 0
        %1466 = vmatpush1.bf16.msra.mxu0 0
        %1467 = vmatprep.subr.bf16.mxu0 0
        %1468 = vmatpush1.bf16.msra.mxu0 0
        %1469 = vmatprep.subr.bf16.mxu0 0
        %1470 = vmatpush1.bf16.msra.mxu0 0
        %1471 = vmatprep.subr.bf16.mxu0 0
        %1472 = vmatpush1.bf16.msra.mxu0 0
        %1473 = vmatprep.subr.bf16.mxu0 0
        %1474 = vmatpush1.bf16.msra.mxu0 0
        %1475 = vmatprep.subr.bf16.mxu0 0
        %1476 = vmatpush1.bf16.msra.mxu0 0
        %1477 = vmatprep.subr.bf16.mxu0 0
        %1478 = vmatpush1.bf16.msra.mxu0 0
        %1479 = vmatprep.subr.bf16.mxu0 0
        %1480 = vmatpush1.bf16.msra.mxu0 0
        %1481 = vmatprep.subr.bf16.mxu0 0
        %1482 = vmatpush1.bf16.msra.mxu0 0
        %1483 = vmatprep.subr.bf16.mxu0 0
        %1484 = vmatpush1.bf16.msra.mxu0 0
        %1485 = vmatprep.mubr.bf16.mxu0 0
        %1486 = vmatmul.mubr.bf16.gmra.mrb[0].mxu0 %v1451
        %v1487 = vpop.f32.mrb[0].mxu0
        %v1488 = vadd.f32 0.0, %v1487
        %v1489 = vpop.f32.mrb[0].mxu0
        %v1490 = vpop.f32.mrb[0].mxu0
        %v1491 = vadd.f32 0.0, %v1490
        %v1492 = vpop.f32.mrb[0].mxu0
        %1493 = vdwg.mxu0
        %v1498 = vunpack.c.l.b16 %v667
        %v1499 = vunpack.c.l.b16 %v668
        %v1500 = vunpack.c.l.b16 %v669
        %v1501 = vunpack.c.l.b16 %v670
        %v1502 = vpack.c.b16 %v1499, %v1498
        %v1503 = vpack.c.b16 %v1501, %v1500
        %v1507 = vsel %vm696, %v1063, 0
        %1509 = vmatprep.subr.bf16.mxu0 0
        %1510 = vmatpush1.bf16.msra.mxu0 %v1502
        %1511 = vmatprep.subr.bf16.mxu0 0
        %1512 = vmatpush1.bf16.msra.mxu0 %v1503
        %1513 = vmatprep.subr.bf16.mxu0 0
        %1514 = vmatpush1.bf16.msra.mxu0 0
        %1515 = vmatprep.subr.bf16.mxu0 0
        %1516 = vmatpush1.bf16.msra.mxu0 0
        %1517 = vmatprep.subr.bf16.mxu0 0
        %1518 = vmatpush1.bf16.msra.mxu0 0
        %1519 = vmatprep.subr.bf16.mxu0 0
        %1520 = vmatpush1.bf16.msra.mxu0 0
        %1521 = vmatprep.subr.bf16.mxu0 0
        %1522 = vmatpush1.bf16.msra.mxu0 0
        %1523 = vmatprep.subr.bf16.mxu0 0
        %1524 = vmatpush1.bf16.msra.mxu0 0
        %1525 = vmatprep.subr.bf16.mxu0 0
        %1526 = vmatpush1.bf16.msra.mxu0 0
        %1527 = vmatprep.subr.bf16.mxu0 0
        %1528 = vmatpush1.bf16.msra.mxu0 0
        %1529 = vmatprep.subr.bf16.mxu0 0
        %1530 = vmatpush1.bf16.msra.mxu0 0
        %1531 = vmatprep.subr.bf16.mxu0 0
        %1532 = vmatpush1.bf16.msra.mxu0 0
        %1533 = vmatprep.subr.bf16.mxu0 0
        %1534 = vmatpush1.bf16.msra.mxu0 0
        %1535 = vmatprep.subr.bf16.mxu0 0
        %1536 = vmatpush1.bf16.msra.mxu0 0
        %1537 = vmatprep.subr.bf16.mxu0 0
        %1538 = vmatpush1.bf16.msra.mxu0 0
        %1539 = vmatprep.subr.bf16.mxu0 0
        %1540 = vmatpush1.bf16.msra.mxu0 0
        %1541 = vmatprep.mubr.bf16.mxu0 0
        %1542 = vmatmul.mubr.bf16.gmra.mrb[0].mxu0 %v1507
        %v1543 = vpop.f32.mrb[0].mxu0
        %v1544 = vadd.f32 %v1488, %v1543
        %v1545 = vpop.f32.mrb[0].mxu0
        %v1546 = vpop.f32.mrb[0].mxu0
        %v1547 = vadd.f32 %v1491, %v1546
        %v1548 = vpop.f32.mrb[0].mxu0
        %1549 = vdwg.mxu0
        %v1550 = vlaneseq
        %v1551 = vshrl.u32 %v1550, 7
        %v1552 = vsub.s32 0, %v1551
        %v1553 = vrot.slane %v683, %v1552
        %v1554 = vadd.f32 %v1544, %v1553
        %v1555 = vadd.f32 %v1547, %v1553
        %v1556 = vadd.f32 %v640, %v1554
        %v1557 = vadd.f32 %v641, %v1555
        %v1558 = vsel %vm696, %v1556, 0.0
        %1559 = vadd.xlane.f32.xlu0 %v1558
        %v1560 = vpop.xlane.xlu0 %1559
        %v1561 = vsel %vm696, %v1557, 0.0
        %1562 = vadd.xlane.f32.xlu0 %v1561
        %v1563 = vpop.xlane.xlu0 %1562
        %v1564 = vrcp.pop 32.0
        %v1565 = vmul.f32 %v1560, %v1564
        %v1566 = vmul.f32 %v1563, %v1564
        %v1567 = vsub.f32 %v1556, %v1565
        %v1568 = vsub.f32 %v1557, %v1566
        %v1569 = vmul.f32 %v1567, %v1567
        %v1570 = vmul.f32 %v1568, %v1568
        %v1571 = vsel %vm696, %v1569, 0.0
        %1572 = vadd.xlane.f32.xlu0 %v1571
        %v1573 = vpop.xlane.xlu0 %1572
        %v1574 = vsel %vm696, %v1570, 0.0
        %1575 = vadd.xlane.f32.xlu0 %v1574
        %v1576 = vpop.xlane.xlu0 %1575
        %v1577 = vmul.f32 %v1573, %v1564
        %v1578 = vmul.f32 %v1576, %v1564
        %v1579 = vadd.f32 %v1577, 1e-05
        %v1580 = vadd.f32 %v1578, 1e-05
        %v1581 = vrsqrt.pop %v1579
        %v1582 = vrsqrt.pop %v1580
        %v1583 = vmul.f32 %v1567, %v1581
        %v1584 = vmul.f32 %v1568, %v1582
        %v1585 = vlaneseq
        %v1586 = vshrl.u32 %v1585, 7
        %v1587 = vsub.s32 1, %v1586
        %v1588 = vrot.slane %v683, %v1587
        %v1589 = vmul.f32 %v1583, %v1588
        %v1590 = vmul.f32 %v1584, %v1588
        %v1591 = vlaneseq
        %v1592 = vshrl.u32 %v1591, 7
        %v1593 = vsub.s32 2, %v1592
        %v1594 = vrot.slane %v683, %v1593
        %v1595 = vadd.f32 %v1589, %v1594
        %v1596 = vadd.f32 %v1590, %v1594
        %v1597 = vpack.c.bf16 %v1596, %v1595
        %v1598 = vlaneseq
        %v1599 = vshrl.u32 %v1598, 7
        %v1600 = vsub.s32 3, %v1599
        %v1601 = vrot.slane %v683, %v1600
        %v1606 = vunpack.c.l.b16 %v675
        %v1607 = vunpack.c.l.b16 %v676
        %v1608 = vunpack.c.l.b16 %v677
        %v1609 = vunpack.c.l.b16 %v678
        %v1610 = vpack.c.b16 %v1607, %v1606
        %v1611 = vpack.c.b16 %v1609, %v1608
        %v1615 = vsel %vm696, %v1597, 0
        %1617 = vmatprep.subr.bf16.mxu0 0
        %1618 = vmatpush1.bf16.msra.mxu0 %v1610
        %1619 = vmatprep.subr.bf16.mxu0 0
        %1620 = vmatpush1.bf16.msra.mxu0 %v1611
        %1621 = vmatprep.subr.bf16.mxu0 0
        %1622 = vmatpush1.bf16.msra.mxu0 0
        %1623 = vmatprep.subr.bf16.mxu0 0
        %1624 = vmatpush1.bf16.msra.mxu0 0
        %1625 = vmatprep.subr.bf16.mxu0 0
        %1626 = vmatpush1.bf16.msra.mxu0 0
        %1627 = vmatprep.subr.bf16.mxu0 0
        %1628 = vmatpush1.bf16.msra.mxu0 0
        %1629 = vmatprep.subr.bf16.mxu0 0
        %1630 = vmatpush1.bf16.msra.mxu0 0
        %1631 = vmatprep.subr.bf16.mxu0 0
        %1632 = vmatpush1.bf16.msra.mxu0 0
        %1633 = vmatprep.subr.bf16.mxu0 0
        %1634 = vmatpush1.bf16.msra.mxu0 0
        %1635 = vmatprep.subr.bf16.mxu0 0
        %1636 = vmatpush1.bf16.msra.mxu0 0
        %1637 = vmatprep.subr.bf16.mxu0 0
        %1638 = vmatpush1.bf16.msra.mxu0 0
        %1639 = vmatprep.subr.bf16.mxu0 0
        %1640 = vmatpush1.bf16.msra.mxu0 0
        %1641 = vmatprep.subr.bf16.mxu0 0
        %1642 = vmatpush1.bf16.msra.mxu0 0
        %1643 = vmatprep.subr.bf16.mxu0 0
        %1644 = vmatpush1.bf16.msra.mxu0 0
        %1645 = vmatprep.subr.bf16.mxu0 0
        %1646 = vmatpush1.bf16.msra.mxu0 0
        %1647 = vmatprep.subr.bf16.mxu0 0
        %1648 = vmatpush1.bf16.msra.mxu0 0
        %1649 = vmatprep.mubr.bf16.mxu0 0
        %1650 = vmatmul.mubr.bf16.gmra.mrb[0].mxu0 %v1615
        %v1651 = vpop.f32.mrb[0].mxu0
        %v1652 = vadd.f32 %v1601, %v1651
        %v1653 = vpop.f32.mrb[0].mxu0
        %v1654 = vpop.f32.mrb[0].mxu0
        %v1655 = vadd.f32 %v1601, %v1654
        %v1656 = vpop.f32.mrb[0].mxu0
        %1657 = vdwg.mxu0
        %v1658 = vmax.f32 %v1652, 0.0
        %v1659 = vmax.f32 %v1655, 0.0
        %v1660 = vpack.c.bf16 %v1659, %v1658
        %v1661 = vlaneseq
        %v1662 = vshrl.u32 %v1661, 7
        %v1663 = vsub.s32 4, %v1662
        %v1664 = vrot.slane %v683, %v1663
        %v1669 = vunpack.c.l.b16 %v679
        %v1670 = vunpack.c.l.b16 %v680
        %v1671 = vunpack.c.l.b16 %v681
        %v1672 = vunpack.c.l.b16 %v682
        %v1673 = vpack.c.b16 %v1670, %v1669
        %v1674 = vpack.c.b16 %v1672, %v1671
        %v1678 = vsel %vm696, %v1660, 0
        %1680 = vmatprep.subr.bf16.mxu0 0
        %1681 = vmatpush1.bf16.msra.mxu0 %v1673
        %1682 = vmatprep.subr.bf16.mxu0 0
        %1683 = vmatpush1.bf16.msra.mxu0 %v1674
        %1684 = vmatprep.subr.bf16.mxu0 0
        %1685 = vmatpush1.bf16.msra.mxu0 0
        %1686 = vmatprep.subr.bf16.mxu0 0
        %1687 = vmatpush1.bf16.msra.mxu0 0
        %1688 = vmatprep.subr.bf16.mxu0 0
        %1689 = vmatpush1.bf16.msra.mxu0 0
        %1690 = vmatprep.subr.bf16.mxu0 0
        %1691 = vmatpush1.bf16.msra.mxu0 0
        %1692 = vmatprep.subr.bf16.mxu0 0
        %1693 = vmatpush1.bf16.msra.mxu0 0
        %1694 = vmatprep.subr.bf16.mxu0 0
        %1695 = vmatpush1.bf16.msra.mxu0 0
        %1696 = vmatprep.subr.bf16.mxu0 0
        %1697 = vmatpush1.bf16.msra.mxu0 0
        %1698 = vmatprep.subr.bf16.mxu0 0
        %1699 = vmatpush1.bf16.msra.mxu0 0
        %1700 = vmatprep.subr.bf16.mxu0 0
        %1701 = vmatpush1.bf16.msra.mxu0 0
        %1702 = vmatprep.subr.bf16.mxu0 0
        %1703 = vmatpush1.bf16.msra.mxu0 0
        %1704 = vmatprep.subr.bf16.mxu0 0
        %1705 = vmatpush1.bf16.msra.mxu0 0
        %1706 = vmatprep.subr.bf16.mxu0 0
        %1707 = vmatpush1.bf16.msra.mxu0 0
        %1708 = vmatprep.subr.bf16.mxu0 0
        %1709 = vmatpush1.bf16.msra.mxu0 0
        %1710 = vmatprep.subr.bf16.mxu0 0
        %1711 = vmatpush1.bf16.msra.mxu0 0
        %1712 = vmatprep.mubr.bf16.mxu0 0
        %1713 = vmatmul.mubr.bf16.gmra.mrb[0].mxu0 %v1678
        %v1714 = vpop.f32.mrb[0].mxu0
        %v1715 = vadd.f32 %v1664, %v1714
        %v1716 = vpop.f32.mrb[0].mxu0
        %v1717 = vpop.f32.mrb[0].mxu0
        %v1718 = vadd.f32 %v1664, %v1717
        %v1719 = vpop.f32.mrb[0].mxu0
        %1720 = vdwg.mxu0
        %v1721 = vadd.f32 %v1595, %v1715
        %v1722 = vadd.f32 %v1596, %v1718
        %v1723 = vsel %vm696, %v1721, 0.0
        %1724 = vadd.xlane.f32.xlu0 %v1723
        %v1725 = vpop.xlane.xlu0 %1724
        %v1726 = vsel %vm696, %v1722, 0.0
        %1727 = vadd.xlane.f32.xlu0 %v1726
        %v1728 = vpop.xlane.xlu0 %1727
        %v1729 = vmul.f32 %v1725, %v1564
        %v1730 = vmul.f32 %v1728, %v1564
        %v1731 = vsub.f32 %v1721, %v1729
        %v1732 = vsub.f32 %v1722, %v1730
        %v1733 = vmul.f32 %v1731, %v1731
        %v1734 = vmul.f32 %v1732, %v1732
        %v1735 = vsel %vm696, %v1733, 0.0
        %1736 = vadd.xlane.f32.xlu0 %v1735
        %v1737 = vpop.xlane.xlu0 %1736
        %v1738 = vsel %vm696, %v1734, 0.0
        %1739 = vadd.xlane.f32.xlu0 %v1738
        %v1740 = vpop.xlane.xlu0 %1739
        %v1741 = vmul.f32 %v1737, %v1564
        %v1742 = vmul.f32 %v1740, %v1564
        %v1743 = vadd.f32 %v1741, 1e-05
        %v1744 = vadd.f32 %v1742, 1e-05
        %v1745 = vrsqrt.pop %v1743
        %v1746 = vrsqrt.pop %v1744
        %v1747 = vmul.f32 %v1731, %v1745
        %v1748 = vmul.f32 %v1732, %v1746
        %v1749 = vlaneseq
        %v1750 = vshrl.u32 %v1749, 7
        %v1751 = vsub.s32 5, %v1750
        %v1752 = vrot.slane %v683, %v1751
        %v1753 = vmul.f32 %v1747, %v1752
        %v1754 = vmul.f32 %v1748, %v1752
        %v1755 = vlaneseq
        %v1756 = vshrl.u32 %v1755, 7
        %v1757 = vsub.s32 6, %v1756
        %v1758 = vrot.slane %v683, %v1757
        %v1759 = vadd.f32 %v1753, %v1758
        %v1760 = vadd.f32 %v1754, %v1758
        %1761 = vst.msk [vmem:[#allocation2] sm:$0xff] %vm696, %v1759
        %1762 = vst.msk [vmem:[#allocation2 + $0x8] sm:$0xff] %vm696, %v1760
        %p1763 = scmp.eq.s32.totalorder %s38, 1
        // Predicated region
        $region97: #{tpu_custom_call.1} parent=59 // pred_check
          %p1764 = pneg %p1763
        $region98: #{tpu_custom_call.1} parent=59 // pred_check_branch
          %1766 = sbr.rel (%p1764) target = $region100
        $region99: #{tpu_custom_call.1} parent=59 // pred_region
          %v1767 = vsel %vm696, %v1759, 0.0
          %v1768 = vrot.slane %v1767, 4
          %v1769 = vadd.f32 %v1767, %v1768
          %v1770 = vrot.slane %v1769, 2
          %v1771 = vadd.f32 %v1769, %v1770
          %v1772 = vrot.slane %v1771, 1
          %v1773 = vadd.f32 %v1771, %v1772
          %v1774 = vsel %vm696, %v1760, 0.0
          %v1775 = vrot.slane %v1774, 4
          %v1776 = vadd.f32 %v1774, %v1775
          %v1777 = vrot.slane %v1776, 2
          %v1778 = vadd.f32 %v1776, %v1777
          %v1779 = vrot.slane %v1778, 1
          %v1780 = vadd.f32 %v1778, %v1779
          %v1781 = vrcp.pop 8.0
          %v1782 = vmul.f32 %v1773, %v1781
          %v1783 = vmul.f32 %v1780, %v1781
          %v1784 = vpack.c.bf16 %v1782, %v1782
          %v1785 = vpack.c.bf16 %v1783, %v1783
          %v1786 = vld [vmem:[#allocation15] sm:$0xf]
          %v1787 = vld [vmem:[#allocation15 + $0x4] sm:$0xf]
          %v1788 = vld [vmem:[#allocation15 + $0x8] sm:$0xf]
          %v1789 = vld [vmem:[#allocation15 + $0xc] sm:$0xf]
          %v1790 = vld [vmem:[%s9] sm:$0x1]
          %v1792 = vlaneseq
          %v1793 = vshrl.u32 %v1792, 7
          %v1794 = vsub.s32 0, %v1793
          %v1795 = vrot.slane %v1790, %v1794
          %v1799 = vunpack.c.l.b16 %v1784
          %v1800 = vunpack.c.l.b16 %v1785
          %vm1801 = vcmask 1041409
          %v1802 = vsel %vm1801, %v1800, %v1799
          %v1803 = vpack.c.b16 %v1802, %v1802
          %v1808 = vunpack.c.l.b16 %v1786
          %v1809 = vunpack.c.l.b16 %v1787
          %v1810 = vunpack.c.l.b16 %v1788
          %v1811 = vunpack.c.l.b16 %v1789
          %v1812 = vpack.c.b16 %v1809, %v1808
          %v1813 = vpack.c.b16 %v1811, %v1810
          %v1817 = vsel %vm696, %v1803, 0
          %1819 = vmatprep.subr.bf16.mxu0 0
          %1820 = vmatpush1.bf16.msra.mxu0 %v1812
          %1821 = vmatprep.subr.bf16.mxu0 0
          %1822 = vmatpush1.bf16.msra.mxu0 %v1813
          %1823 = vmatprep.subr.bf16.mxu0 0
          %1824 = vmatpush1.bf16.msra.mxu0 0
          %1825 = vmatprep.subr.bf16.mxu0 0
          %1826 = vmatpush1.bf16.msra.mxu0 0
          %1827 = vmatprep.subr.bf16.mxu0 0
          %1828 = vmatpush1.bf16.msra.mxu0 0
          %1829 = vmatprep.subr.bf16.mxu0 0
          %1830 = vmatpush1.bf16.msra.mxu0 0
          %1831 = vmatprep.subr.bf16.mxu0 0
          %1832 = vmatpush1.bf16.msra.mxu0 0
          %1833 = vmatprep.subr.bf16.mxu0 0
          %1834 = vmatpush1.bf16.msra.mxu0 0
          %1835 = vmatprep.subr.bf16.mxu0 0
          %1836 = vmatpush1.bf16.msra.mxu0 0
          %1837 = vmatprep.subr.bf16.mxu0 0
          %1838 = vmatpush1.bf16.msra.mxu0 0
          %1839 = vmatprep.subr.bf16.mxu0 0
          %1840 = vmatpush1.bf16.msra.mxu0 0
          %1841 = vmatprep.subr.bf16.mxu0 0
          %1842 = vmatpush1.bf16.msra.mxu0 0
          %1843 = vmatprep.subr.bf16.mxu0 0
          %1844 = vmatpush1.bf16.msra.mxu0 0
          %1845 = vmatprep.subr.bf16.mxu0 0
          %1846 = vmatpush1.bf16.msra.mxu0 0
          %1847 = vmatprep.subr.bf16.mxu0 0
          %1848 = vmatpush1.bf16.msra.mxu0 0
          %1849 = vmatprep.subr.bf16.mxu0 0
          %1850 = vmatpush1.bf16.msra.mxu0 0
          %1851 = vmatprep.mubr.bf16.mxu0 0
          %1852 = vmatmul.mubr.bf16.gmra.mrb[0].mxu0 %v1817
          %v1853 = vpop.f32.mrb[0].mxu0
          %v1854 = vadd.f32 %v1795, %v1853
          %v1855 = vpop.f32.mrb[0].mxu0
          %v1856 = vpop.f32.mrb[0].mxu0
          %v1857 = vpop.f32.mrb[0].mxu0
          %1858 = vdwg.mxu0
          %vm1859 = vcmask 1041408
          %v1860 = vsel %vm1859, %v1854, -inf
          %1861 = vmax.xlane.f32.xlu0 %v1860
          %v1862 = vpop.xlane.xlu0 %1861
          %v1863 = vsub.f32 %v1854, %v1862
          %v1864 = vmul.f32 %v1863, 1.442695
          %v1865 = vpow.pop %v1864
          %v1866 = vsel %vm1859, %v1865, 0.0
          %1867 = vadd.xlane.f32.xlu0 %v1866
          %v1868 = vpop.xlane.xlu0 %1867
          %v1869 = vlog2.pop %v1868
          %v1870 = vmul.f32 %v1869, 0.6931472
          %v1871 = vadd.f32 %v1862, %v1870
          %v1872 = vsub.f32 %v1854, %v1871
          %1873 = vst [vmem:[#allocation17] sm:$0x3] %v1872
        $region100: #{tpu_custom_call.1} parent=59 // pred_fallthru
          _
        // Predicated region
        $region101: #{tpu_custom_call.1} parent=59 // pred_check
          %p1874 = pneg %p313
        $region102: #{tpu_custom_call.1} parent=59 // pred_check_branch
          %1876 = sbr.rel (%p1874) target = $region104
        $region103: #{tpu_custom_call.1} parent=59 // pred_region
          %s1878 = ssub.s32 32, 32
          %1879 = vsyncadd [#allocation5], %s1878
          %s1880 = smul.addr %s37, 32
          %s1881 = scalar_lea.hbm %s10, %s1880
          %s1883 = sshll.u32 [#allocation17], 4
          %s1884 = int_to_ptr.vmem [resolvable:$true] %s1883
          %1886 = dma.vmem_to_hbm [thread:$0]  %s1884, 32, %s1881, [#allocation5]
        $region104: #{tpu_custom_call.1} parent=59 // pred_fallthru
          _
        // Predicated region
        $region105: #{tpu_custom_call.1} parent=59 // pred_check
          %p1887 = pneg %p313
        $region106: #{tpu_custom_call.1} parent=59 // pred_check_branch
          %1889 = sbr.rel (%p1887) target = $region108
        $region107: #{tpu_custom_call.1} parent=59 // pred_region
          %1890 = dma.done [#allocation5], 32
        $region108: #{tpu_custom_call.1} parent=59 // pred_fallthru
          _
      $region60: #{tpu_custom_call.1} parent=5 // pred_fallthru
        _
      %p1891 = scmp.le.s32.totalorder 2, %s28
      // Predicated region
      $region109: #{tpu_custom_call.1} parent=5 // pred_check
        %p1892 = pneg %p1891
      $region110: #{tpu_custom_call.1} parent=5 // pred_check_branch
        %1894 = sbr.rel (%p1892) target = $region112
      $region111: #{tpu_custom_call.1} parent=5 // pred_region
        %s1895 = ssub.s32 %s28, 2
      $region112: #{tpu_custom_call.1} parent=5 // pred_fallthru
        _
    $region6: #{tpu_custom_call.1} parent=1 // loop_footer
      %s32 = sadd.s32 1, %s28
    $region7: #{tpu_custom_call.1} parent=1 // loop_footer_branch
      %27 = sbr.rel target = $region3
    $region8: #{tpu_custom_call.1} parent=1 // loop_exit
      _
    %1896 = vsyncpa [#allocation4], 1
    %s1897 = scalar_lea.sflag [#allocation4], 1
    %1898 = vsyncpa %s1897, 1
    %1899 = vsyncpa [#allocation7], 1
    %s1900 = scalar_lea.sflag [#allocation7], 1
    %1901 = vsyncpa %s1900, 1
    %1902 = vsyncpa [#allocation10], 1
    %s1903 = scalar_lea.sflag [#allocation10], 1
    %1904 = vsyncpa %s1903, 1
    %1905 = vsyncpa [#allocation13], 1
    %s1906 = scalar_lea.sflag [#allocation13], 1
    %1907 = vsyncpa %s1906, 1
    %1908 = vsyncpa [#allocation16], 1
    %1909 = vsyncpa [#allocation5], 1
    %s1910 = scalar_lea.sflag [#allocation5], 1
    %1911 = vsyncpa %s1910, 1

</llo_original>
